<compile_context>
chip_gen: v7x
topology: tpu7x:2x2x1
jax: 0.10.0
libtpu: 0.0.40
codegen_flags: <defaults>
</compile_context>

<pallas_src>
import functools

import jax
import jax.numpy as jnp
from jax.experimental import pallas as pl
from jax.experimental.pallas import tpu as pltpu

BN_EPS = 1e-5


def gcn_fused_kernel(x_ref, abig_ref, wc_ref, bc_ref, wg_ref, wp_ref, o_ref,
                     *, num_layers, batch, nodes, state_size, in_size):
    """Fused 3-layer GCN forward for the whole (small) batch in one program.

    x_ref    : (B, N, Cin)   f32  activations, channels last
    abig_ref : (2BN, 2BN)    bf16 block-diag adjacency over {fw,bw} x batch
    wc_ref   : (L, Cin, S)   bf16 condense weight (BN folded)
    bc_ref   : (L, 1, S)     f32  condense bias   (BN folded)
    wg_ref   : (L, 2B, Cin, S) bf16 per-batch fw/bw GraphConvolution weights
    wp_ref   : (L, 3, S, Cin) bf16 projection conv weight, split [cond|fw|bw]
    o_ref    : (BN, Cin)     f32
    """
    B, N, S, Cin = batch, nodes, state_size, in_size
    BN = B * N
    f32 = jnp.float32
    bf16 = jnp.bfloat16

    # Load once; stays VMEM/vreg resident across all layers.
    X = x_ref[...].reshape(BN, Cin)          # leading-dim collapse: layout-free
    Abig = abig_ref[...]                     # (2BN, 2BN) bf16

    for l in range(num_layers):              # statically unrolled (L = 3)
        Xb = X.astype(bf16)                  # bf16 MXU operands; VPU math in f32

        # Condense branch once on the batch-stacked activations: (BN,Cin)@(Cin,S).
        cond = jnp.maximum(
            jnp.dot(Xb, wc_ref[l], preferred_element_type=f32) + bc_ref[l], 0.0)

        # Per-batch fw/bw input projections, stacked along sublanes only
        # (offsets are multiples of N=16 >= 8: aligned copies, no lane relayout).
        H = jnp.concatenate(
            [jnp.dot(Xb[(g % B) * N:(g % B + 1) * N], wg_ref[l, g],
                     preferred_element_type=f32)
             for g in range(2 * B)], axis=0)                       # (2BN, S)

        # One block-diagonal adjacency matmul covers fw & bw for the whole batch.
        # (GraphConvolution biases are structurally zero here -> dropped.)
        FB = jnp.maximum(
            jnp.dot(Abig, H.astype(bf16), preferred_element_type=f32), 0.0)
        fw = FB[:BN]                          # sublane slices: free
        bw = FB[BN:]

        # Projection conv (BN folded into wp): three accumulating dots against
        # host-split row-slices of wp — no lane concat / lane-offset slices.
        out = (jnp.dot(cond.astype(bf16), wp_ref[l, 0], preferred_element_type=f32)
               + jnp.dot(fw.astype(bf16), wp_ref[l, 1], preferred_element_type=f32)
               + jnp.dot(bw.astype(bf16), wp_ref[l, 2], preferred_element_type=f32))

        X = jnp.maximum(out + X, 0.0)         # residual + ReLU, f32

    # Single full-slab store (lane-dense (8,128) repacking skipped; see header).
    o_ref[...] = X.astype(o_ref.dtype)


def gcn_forward(states, fw_A, bw_A, params, state_size):
    """Full GCN: three stacked GraphConvolutionLayers in one pallas_call.

    states: (B, N, in_size); fw_A, bw_A: (B, N, N).
    """
    B, N, Cin = states.shape
    S = state_size
    L = len(params)
    BN = B * N
    bf16 = jnp.bfloat16
    bn = 1.0 / jnp.sqrt(1.0 + BN_EPS)   # eval-mode BN with default stats

    # Host-side weight prep: fold BN scale, pack/split per layer, cast to bf16.
    wc = jnp.stack([p["wc"] * bn for p in params]).astype(bf16)          # (L,Cin,S)
    bc = jnp.stack([p["bc"] * bn for p in params])                        # (L,1,S) f32
    wg = jnp.stack([jnp.concatenate([p["wfw"], p["wbw"]], axis=0)
                    for p in params]).astype(bf16)                        # (L,2B,Cin,S)
    wp = jnp.stack([(p["wp"] * bn).reshape(3, S, Cin)
                    for p in params]).astype(bf16)                        # (L,3,S,Cin)

    # Block-diagonal adjacency over {fw, bw} x batch: one (2BN,2BN) matmul per
    # layer replaces 2*B tiny per-batch adjacency matmuls.
    blocks = [fw_A[b] for b in range(B)] + [bw_A[b] for b in range(B)]
    abig = jax.scipy.linalg.block_diag(*blocks).astype(bf16)              # (2BN,2BN)

    kernel = functools.partial(gcn_fused_kernel, num_layers=L, batch=B,
                               nodes=N, state_size=S, in_size=Cin)
    out2d = pl.pallas_call(
        kernel,
        out_shape=jax.ShapeDtypeStruct((BN, Cin), jnp.float32),
        grid_spec=pltpu.PrefetchScalarGridSpec(
            num_scalar_prefetch=0,
            grid=(1,),
            in_specs=[
                pl.BlockSpec((B, N, Cin), lambda i: (0, 0, 0)),             # x
                pl.BlockSpec((2 * BN, 2 * BN), lambda i: (0, 0)),           # abig
                pl.BlockSpec((L, Cin, S), lambda i: (0, 0, 0)),             # wc
                pl.BlockSpec((L, 1, S), lambda i: (0, 0, 0)),               # bc
                pl.BlockSpec((L, 2 * B, Cin, S), lambda i: (0, 0, 0, 0)),   # wg
                pl.BlockSpec((L, 3, S, Cin), lambda i: (0, 0, 0, 0)),       # wp
            ],
            out_specs=pl.BlockSpec((BN, Cin), lambda i: (0, 0)),
        ),
        compiler_params=pltpu.CompilerParams(
            dimension_semantics=("arbitrary",)),
    )(states, abig, wc, bc, wg, wp)
    return out2d.reshape(B, N, Cin)   # row-major metadata reshape, free


# ----------------------- pure-JAX reference (for checking) -----------------------
def _layer_ref(x, fwA, bwA, p):
    bn = 1.0 / jnp.sqrt(1.0 + BN_EPS)
    cond = jnp.maximum((jnp.einsum("bnc,cs->bns", x, p["wc"]) + p["bc"][0]) * bn, 0.0)
    fw = jnp.maximum(jnp.einsum("bnm,bms->bns",
                                fwA, jnp.einsum("bnc,bcs->bns", x, p["wfw"]))
                     + p["bfw"][0], 0.0)
    bw = jnp.maximum(jnp.einsum("bnm,bms->bns",
                                bwA, jnp.einsum("bnc,bcs->bns", x, p["wbw"]))
                     + p["bbw"][0], 0.0)
    upd = jnp.concatenate([cond, fw, bw], axis=-1)
    out = jnp.einsum("bnk,kc->bnc", upd, p["wp"]) * bn
    return jnp.maximum(out + x, 0.0)


def _gcn_ref(states, fwA, bwA, params):
    x = states
    for p in params:
        x = _layer_ref(x, fwA, bwA, p)
    return x


# --------------------------------- parameter init ---------------------------------
def init_layer_params(key, B, in_size, state_size):
    ks = jax.random.split(key, 4)
    S = state_size
    # xavier_normal(gain=0.02) std for a (B, in, S) tensor (PyTorch fan convention)
    xav_std = 0.02 * jnp.sqrt(2.0 / (in_size * S + B * S))
    return {
        "wc": jax.random.normal(ks[0], (in_size, S), jnp.float32) * 0.05,
        "bc": jax.random.normal(ks[1], (1, S), jnp.float32) * 0.05,
        "wfw": jax.random.normal(ks[2], (B, in_size, S), jnp.float32) * xav_std,
        "bfw": jnp.zeros((1, S), jnp.float32),
        "wbw": jax.random.normal(ks[3], (B, in_size, S), jnp.float32) * xav_std,
        "bbw": jnp.zeros((1, S), jnp.float32),
        "wp": jax.random.normal(jax.random.fold_in(key, 99),
                                (3 * S, in_size), jnp.float32) * 0.05,
    }


if __name__ == "__main__":
    B, N, IN_SIZE, STATE_SIZE = 2, 16, 32, 16

    root = jax.random.PRNGKey(0)
    k_states, k_fw, k_bw, k_p1, k_p2, k_p3 = jax.random.split(root, 6)

    states = jax.random.normal(k_states, (B, N, IN_SIZE), jnp.float32)
    # row-normalized random adjacency matrices
    fw_A = jax.nn.softmax(jax.random.normal(k_fw, (B, N, N), jnp.float32), axis=-1)
    bw_A = jax.nn.softmax(jax.random.normal(k_bw, (B, N, N), jnp.float32), axis=-1)

    params = [init_layer_params(k, B, IN_SIZE, STATE_SIZE) for k in (k_p1, k_p2, k_p3)]

    out = gcn_forward(states, fw_A, bw_A, params, STATE_SIZE)
    out = jax.block_until_ready(out)

    ref = _gcn_ref(states, fw_A, bw_A, params)
    assert out.shape == (B, N, IN_SIZE)
    # Tolerance loosened vs the all-f32 version to account for bf16 MXU operands
    # (f32 accumulation) across 3 residual layers.
    assert jnp.allclose(out, ref, rtol=2e-2, atol=2e-2), "mismatch vs pure-JAX reference"

    print("KERNEL_OK")
</pallas_src>

<mosaic_0001>
module attributes {stable_mosaic.version = 11 : i64} {
  func.func @gcn_fused_kernel(%arg0: i32, %arg1: memref<2x16x32xf32, #tpu.memory_space<vmem>>, %arg2: memref<64x64xbf16, #tpu.memory_space<vmem>>, %arg3: memref<3x32x16xbf16, #tpu.memory_space<vmem>>, %arg4: memref<3x1x16xf32, #tpu.memory_space<vmem>>, %arg5: memref<3x4x32x16xbf16, #tpu.memory_space<vmem>>, %arg6: memref<3x3x16x32xbf16, #tpu.memory_space<vmem>>, %arg7: memref<32x32xf32, #tpu.memory_space<vmem>>) attributes {dimension_semantics = [#tpu.dimension_semantics<arbitrary>], iteration_bounds = array<i64: 1>, scalar_prefetch = 0 : i64, scratch_operands = 0 : i64, tpu.core_type = #tpu.core_type<tc>, window_params = [{pipeline_mode = #tpu.pipeline_mode<synchronous>, transform_indices = @transform_0, window_bounds = array<i64: 2, 16, 32>}, {pipeline_mode = #tpu.pipeline_mode<synchronous>, transform_indices = @transform_1, window_bounds = array<i64: 64, 64>}, {pipeline_mode = #tpu.pipeline_mode<synchronous>, transform_indices = @transform_2, window_bounds = array<i64: 3, 32, 16>}, {pipeline_mode = #tpu.pipeline_mode<synchronous>, transform_indices = @transform_3, window_bounds = array<i64: 3, 1, 16>}, {pipeline_mode = #tpu.pipeline_mode<synchronous>, transform_indices = @transform_4, window_bounds = array<i64: 3, 4, 32, 16>}, {pipeline_mode = #tpu.pipeline_mode<synchronous>, transform_indices = @transform_5, window_bounds = array<i64: 3, 3, 16, 32>}, {pipeline_mode = #tpu.pipeline_mode<synchronous>, transform_indices = @transform_6, window_bounds = array<i64: 32, 32>}]} {
    %c0 = arith.constant 0 : index
    %c0_0 = arith.constant 0 : index
    %c0_1 = arith.constant 0 : index
    %0 = vector.load %arg1[%c0, %c0_0, %c0_1] : memref<2x16x32xf32, #tpu.memory_space<vmem>>, vector<2x16x32xf32>
    %1 = vector.shape_cast %0 : vector<2x16x32xf32> to vector<32x32xf32>
    %c0_2 = arith.constant 0 : index
    %c0_3 = arith.constant 0 : index
    %2 = vector.load %arg2[%c0_2, %c0_3] : memref<64x64xbf16, #tpu.memory_space<vmem>>, vector<64x64xbf16>
    %3 = arith.truncf %1 : vector<32x32xf32> to vector<32x32xbf16>
    %c0_4 = arith.constant 0 : index
    %c0_5 = arith.constant 0 : index
    %c0_6 = arith.constant 0 : index
    %4 = vector.load %arg3[%c0_4, %c0_5, %c0_6] : memref<3x32x16xbf16, #tpu.memory_space<vmem>>, vector<1x32x16xbf16>
    %5 = vector.shape_cast %4 : vector<1x32x16xbf16> to vector<32x16xbf16>
    %cst = arith.constant dense<0.000000e+00> : vector<32x16xf32>
    %6 = tpu.matmul %3, %5, %cst {dimension_numbers = #tpu.dot_dimension_numbers<[1], [0], [0], [1], [0, 0, 1, 1], [], []>} : vector<32x32xbf16>, vector<32x16xbf16>, vector<32x16xf32> -> vector<32x16xf32>
    %c0_7 = arith.constant 0 : index
    %c0_8 = arith.constant 0 : index
    %c0_9 = arith.constant 0 : index
    %7 = vector.load %arg4[%c0_7, %c0_8, %c0_9] : memref<3x1x16xf32, #tpu.memory_space<vmem>>, vector<1x1x16xf32>
    %8 = vector.shape_cast %7 : vector<1x1x16xf32> to vector<1x16xf32>
    %9 = vector.broadcast %8 : vector<1x16xf32> to vector<32x16xf32>
    %10 = arith.addf %6, %9 : vector<32x16xf32>
    %cst_10 = arith.constant 0.000000e+00 : f32
    %11 = vector.broadcast %cst_10 : f32 to vector<32x16xf32>
    %12 = arith.maximumf %10, %11 : vector<32x16xf32>
    %13 = vector.extract_strided_slice %3 {offsets = [0, 0], sizes = [16, 32], strides = [1, 1]} : vector<32x32xbf16> to vector<16x32xbf16>
    %c0_11 = arith.constant 0 : index
    %c0_12 = arith.constant 0 : index
    %c0_13 = arith.constant 0 : index
    %c0_14 = arith.constant 0 : index
    %14 = vector.load %arg5[%c0_11, %c0_12, %c0_13, %c0_14] : memref<3x4x32x16xbf16, #tpu.memory_space<vmem>>, vector<1x1x32x16xbf16>
    %15 = vector.shape_cast %14 : vector<1x1x32x16xbf16> to vector<32x16xbf16>
    %cst_15 = arith.constant dense<0.000000e+00> : vector<16x16xf32>
    %16 = tpu.matmul %13, %15, %cst_15 {dimension_numbers = #tpu.dot_dimension_numbers<[1], [0], [0], [1], [0, 0, 1, 1], [], []>} : vector<16x32xbf16>, vector<32x16xbf16>, vector<16x16xf32> -> vector<16x16xf32>
    %17 = vector.extract_strided_slice %3 {offsets = [16, 0], sizes = [16, 32], strides = [1, 1]} : vector<32x32xbf16> to vector<16x32xbf16>
    %c0_16 = arith.constant 0 : index
    %c1 = arith.constant 1 : index
    %c0_17 = arith.constant 0 : index
    %c0_18 = arith.constant 0 : index
    %18 = vector.load %arg5[%c0_16, %c1, %c0_17, %c0_18] : memref<3x4x32x16xbf16, #tpu.memory_space<vmem>>, vector<1x1x32x16xbf16>
    %19 = vector.shape_cast %18 : vector<1x1x32x16xbf16> to vector<32x16xbf16>
    %cst_19 = arith.constant dense<0.000000e+00> : vector<16x16xf32>
    %20 = tpu.matmul %17, %19, %cst_19 {dimension_numbers = #tpu.dot_dimension_numbers<[1], [0], [0], [1], [0, 0, 1, 1], [], []>} : vector<16x32xbf16>, vector<32x16xbf16>, vector<16x16xf32> -> vector<16x16xf32>
    %21 = vector.extract_strided_slice %3 {offsets = [0, 0], sizes = [16, 32], strides = [1, 1]} : vector<32x32xbf16> to vector<16x32xbf16>
    %c0_20 = arith.constant 0 : index
    %c2 = arith.constant 2 : index
    %c0_21 = arith.constant 0 : index
    %c0_22 = arith.constant 0 : index
    %22 = vector.load %arg5[%c0_20, %c2, %c0_21, %c0_22] : memref<3x4x32x16xbf16, #tpu.memory_space<vmem>>, vector<1x1x32x16xbf16>
    %23 = vector.shape_cast %22 : vector<1x1x32x16xbf16> to vector<32x16xbf16>
    %cst_23 = arith.constant dense<0.000000e+00> : vector<16x16xf32>
    %24 = tpu.matmul %21, %23, %cst_23 {dimension_numbers = #tpu.dot_dimension_numbers<[1], [0], [0], [1], [0, 0, 1, 1], [], []>} : vector<16x32xbf16>, vector<32x16xbf16>, vector<16x16xf32> -> vector<16x16xf32>
    %25 = vector.extract_strided_slice %3 {offsets = [16, 0], sizes = [16, 32], strides = [1, 1]} : vector<32x32xbf16> to vector<16x32xbf16>
    %c0_24 = arith.constant 0 : index
    %c3 = arith.constant 3 : index
    %c0_25 = arith.constant 0 : index
    %c0_26 = arith.constant 0 : index
    %26 = vector.load %arg5[%c0_24, %c3, %c0_25, %c0_26] : memref<3x4x32x16xbf16, #tpu.memory_space<vmem>>, vector<1x1x32x16xbf16>
    %27 = vector.shape_cast %26 : vector<1x1x32x16xbf16> to vector<32x16xbf16>
    %cst_27 = arith.constant dense<0.000000e+00> : vector<16x16xf32>
    %28 = tpu.matmul %25, %27, %cst_27 {dimension_numbers = #tpu.dot_dimension_numbers<[1], [0], [0], [1], [0, 0, 1, 1], [], []>} : vector<16x32xbf16>, vector<32x16xbf16>, vector<16x16xf32> -> vector<16x16xf32>
    %29 = tpu.concatenate %16, %20, %24, %28 in 0 : vector<16x16xf32>, vector<16x16xf32>, vector<16x16xf32>, vector<16x16xf32> -> vector<64x16xf32>
    %30 = arith.truncf %29 : vector<64x16xf32> to vector<64x16xbf16>
    %cst_28 = arith.constant dense<0.000000e+00> : vector<64x16xf32>
    %31 = tpu.matmul %2, %30, %cst_28 {dimension_numbers = #tpu.dot_dimension_numbers<[1], [0], [0], [1], [0, 0, 1, 1], [], []>} : vector<64x64xbf16>, vector<64x16xbf16>, vector<64x16xf32> -> vector<64x16xf32>
    %cst_29 = arith.constant 0.000000e+00 : f32
    %32 = vector.broadcast %cst_29 : f32 to vector<64x16xf32>
    %33 = arith.maximumf %31, %32 : vector<64x16xf32>
    %34 = vector.extract_strided_slice %33 {offsets = [0, 0], sizes = [32, 16], strides = [1, 1]} : vector<64x16xf32> to vector<32x16xf32>
    %35 = vector.extract_strided_slice %33 {offsets = [32, 0], sizes = [32, 16], strides = [1, 1]} : vector<64x16xf32> to vector<32x16xf32>
    %36 = arith.truncf %12 : vector<32x16xf32> to vector<32x16xbf16>
    %c0_30 = arith.constant 0 : index
    %c0_31 = arith.constant 0 : index
    %c0_32 = arith.constant 0 : index
    %c0_33 = arith.constant 0 : index
    %37 = vector.load %arg6[%c0_30, %c0_31, %c0_32, %c0_33] : memref<3x3x16x32xbf16, #tpu.memory_space<vmem>>, vector<1x1x16x32xbf16>
    %38 = vector.shape_cast %37 : vector<1x1x16x32xbf16> to vector<16x32xbf16>
    %cst_34 = arith.constant dense<0.000000e+00> : vector<32x32xf32>
    %39 = tpu.matmul %36, %38, %cst_34 {dimension_numbers = #tpu.dot_dimension_numbers<[1], [0], [0], [1], [0, 0, 1, 1], [], []>} : vector<32x16xbf16>, vector<16x32xbf16>, vector<32x32xf32> -> vector<32x32xf32>
    %40 = arith.truncf %34 : vector<32x16xf32> to vector<32x16xbf16>
    %c0_35 = arith.constant 0 : index
    %c1_36 = arith.constant 1 : index
    %c0_37 = arith.constant 0 : index
    %c0_38 = arith.constant 0 : index
    %41 = vector.load %arg6[%c0_35, %c1_36, %c0_37, %c0_38] : memref<3x3x16x32xbf16, #tpu.memory_space<vmem>>, vector<1x1x16x32xbf16>
    %42 = vector.shape_cast %41 : vector<1x1x16x32xbf16> to vector<16x32xbf16>
    %cst_39 = arith.constant dense<0.000000e+00> : vector<32x32xf32>
    %43 = tpu.matmul %40, %42, %cst_39 {dimension_numbers = #tpu.dot_dimension_numbers<[1], [0], [0], [1], [0, 0, 1, 1], [], []>} : vector<32x16xbf16>, vector<16x32xbf16>, vector<32x32xf32> -> vector<32x32xf32>
    %44 = arith.addf %39, %43 : vector<32x32xf32>
    %45 = arith.truncf %35 : vector<32x16xf32> to vector<32x16xbf16>
    %c0_40 = arith.constant 0 : index
    %c2_41 = arith.constant 2 : index
    %c0_42 = arith.constant 0 : index
    %c0_43 = arith.constant 0 : index
    %46 = vector.load %arg6[%c0_40, %c2_41, %c0_42, %c0_43] : memref<3x3x16x32xbf16, #tpu.memory_space<vmem>>, vector<1x1x16x32xbf16>
    %47 = vector.shape_cast %46 : vector<1x1x16x32xbf16> to vector<16x32xbf16>
    %cst_44 = arith.constant dense<0.000000e+00> : vector<32x32xf32>
    %48 = tpu.matmul %45, %47, %cst_44 {dimension_numbers = #tpu.dot_dimension_numbers<[1], [0], [0], [1], [0, 0, 1, 1], [], []>} : vector<32x16xbf16>, vector<16x32xbf16>, vector<32x32xf32> -> vector<32x32xf32>
    %49 = arith.addf %44, %48 : vector<32x32xf32>
    %50 = arith.addf %49, %1 : vector<32x32xf32>
    %cst_45 = arith.constant 0.000000e+00 : f32
    %51 = vector.broadcast %cst_45 : f32 to vector<32x32xf32>
    %52 = arith.maximumf %50, %51 : vector<32x32xf32>
    %53 = arith.truncf %52 : vector<32x32xf32> to vector<32x32xbf16>
    %c1_46 = arith.constant 1 : index
    %c0_47 = arith.constant 0 : index
    %c0_48 = arith.constant 0 : index
    %54 = vector.load %arg3[%c1_46, %c0_47, %c0_48] : memref<3x32x16xbf16, #tpu.memory_space<vmem>>, vector<1x32x16xbf16>
    %55 = vector.shape_cast %54 : vector<1x32x16xbf16> to vector<32x16xbf16>
    %cst_49 = arith.constant dense<0.000000e+00> : vector<32x16xf32>
    %56 = tpu.matmul %53, %55, %cst_49 {dimension_numbers = #tpu.dot_dimension_numbers<[1], [0], [0], [1], [0, 0, 1, 1], [], []>} : vector<32x32xbf16>, vector<32x16xbf16>, vector<32x16xf32> -> vector<32x16xf32>
    %c1_50 = arith.constant 1 : index
    %c0_51 = arith.constant 0 : index
    %c0_52 = arith.constant 0 : index
    %57 = vector.load %arg4[%c1_50, %c0_51, %c0_52] : memref<3x1x16xf32, #tpu.memory_space<vmem>>, vector<1x1x16xf32>
    %58 = vector.shape_cast %57 : vector<1x1x16xf32> to vector<1x16xf32>
    %59 = vector.broadcast %58 : vector<1x16xf32> to vector<32x16xf32>
    %60 = arith.addf %56, %59 : vector<32x16xf32>
    %cst_53 = arith.constant 0.000000e+00 : f32
    %61 = vector.broadcast %cst_53 : f32 to vector<32x16xf32>
    %62 = arith.maximumf %60, %61 : vector<32x16xf32>
    %63 = vector.extract_strided_slice %53 {offsets = [0, 0], sizes = [16, 32], strides = [1, 1]} : vector<32x32xbf16> to vector<16x32xbf16>
    %c1_54 = arith.constant 1 : index
    %c0_55 = arith.constant 0 : index
    %c0_56 = arith.constant 0 : index
    %c0_57 = arith.constant 0 : index
    %64 = vector.load %arg5[%c1_54, %c0_55, %c0_56, %c0_57] : memref<3x4x32x16xbf16, #tpu.memory_space<vmem>>, vector<1x1x32x16xbf16>
    %65 = vector.shape_cast %64 : vector<1x1x32x16xbf16> to vector<32x16xbf16>
    %cst_58 = arith.constant dense<0.000000e+00> : vector<16x16xf32>
    %66 = tpu.matmul %63, %65, %cst_58 {dimension_numbers = #tpu.dot_dimension_numbers<[1], [0], [0], [1], [0, 0, 1, 1], [], []>} : vector<16x32xbf16>, vector<32x16xbf16>, vector<16x16xf32> -> vector<16x16xf32>
    %67 = vector.extract_strided_slice %53 {offsets = [16, 0], sizes = [16, 32], strides = [1, 1]} : vector<32x32xbf16> to vector<16x32xbf16>
    %c1_59 = arith.constant 1 : index
    %c1_60 = arith.constant 1 : index
    %c0_61 = arith.constant 0 : index
    %c0_62 = arith.constant 0 : index
    %68 = vector.load %arg5[%c1_59, %c1_60, %c0_61, %c0_62] : memref<3x4x32x16xbf16, #tpu.memory_space<vmem>>, vector<1x1x32x16xbf16>
    %69 = vector.shape_cast %68 : vector<1x1x32x16xbf16> to vector<32x16xbf16>
    %cst_63 = arith.constant dense<0.000000e+00> : vector<16x16xf32>
    %70 = tpu.matmul %67, %69, %cst_63 {dimension_numbers = #tpu.dot_dimension_numbers<[1], [0], [0], [1], [0, 0, 1, 1], [], []>} : vector<16x32xbf16>, vector<32x16xbf16>, vector<16x16xf32> -> vector<16x16xf32>
    %71 = vector.extract_strided_slice %53 {offsets = [0, 0], sizes = [16, 32], strides = [1, 1]} : vector<32x32xbf16> to vector<16x32xbf16>
    %c1_64 = arith.constant 1 : index
    %c2_65 = arith.constant 2 : index
    %c0_66 = arith.constant 0 : index
    %c0_67 = arith.constant 0 : index
    %72 = vector.load %arg5[%c1_64, %c2_65, %c0_66, %c0_67] : memref<3x4x32x16xbf16, #tpu.memory_space<vmem>>, vector<1x1x32x16xbf16>
    %73 = vector.shape_cast %72 : vector<1x1x32x16xbf16> to vector<32x16xbf16>
    %cst_68 = arith.constant dense<0.000000e+00> : vector<16x16xf32>
    %74 = tpu.matmul %71, %73, %cst_68 {dimension_numbers = #tpu.dot_dimension_numbers<[1], [0], [0], [1], [0, 0, 1, 1], [], []>} : vector<16x32xbf16>, vector<32x16xbf16>, vector<16x16xf32> -> vector<16x16xf32>
    %75 = vector.extract_strided_slice %53 {offsets = [16, 0], sizes = [16, 32], strides = [1, 1]} : vector<32x32xbf16> to vector<16x32xbf16>
    %c1_69 = arith.constant 1 : index
    %c3_70 = arith.constant 3 : index
    %c0_71 = arith.constant 0 : index
    %c0_72 = arith.constant 0 : index
    %76 = vector.load %arg5[%c1_69, %c3_70, %c0_71, %c0_72] : memref<3x4x32x16xbf16, #tpu.memory_space<vmem>>, vector<1x1x32x16xbf16>
    %77 = vector.shape_cast %76 : vector<1x1x32x16xbf16> to vector<32x16xbf16>
    %cst_73 = arith.constant dense<0.000000e+00> : vector<16x16xf32>
    %78 = tpu.matmul %75, %77, %cst_73 {dimension_numbers = #tpu.dot_dimension_numbers<[1], [0], [0], [1], [0, 0, 1, 1], [], []>} : vector<16x32xbf16>, vector<32x16xbf16>, vector<16x16xf32> -> vector<16x16xf32>
    %79 = tpu.concatenate %66, %70, %74, %78 in 0 : vector<16x16xf32>, vector<16x16xf32>, vector<16x16xf32>, vector<16x16xf32> -> vector<64x16xf32>
    %80 = arith.truncf %79 : vector<64x16xf32> to vector<64x16xbf16>
    %cst_74 = arith.constant dense<0.000000e+00> : vector<64x16xf32>
    %81 = tpu.matmul %2, %80, %cst_74 {dimension_numbers = #tpu.dot_dimension_numbers<[1], [0], [0], [1], [0, 0, 1, 1], [], []>} : vector<64x64xbf16>, vector<64x16xbf16>, vector<64x16xf32> -> vector<64x16xf32>
    %cst_75 = arith.constant 0.000000e+00 : f32
    %82 = vector.broadcast %cst_75 : f32 to vector<64x16xf32>
    %83 = arith.maximumf %81, %82 : vector<64x16xf32>
    %84 = vector.extract_strided_slice %83 {offsets = [0, 0], sizes = [32, 16], strides = [1, 1]} : vector<64x16xf32> to vector<32x16xf32>
    %85 = vector.extract_strided_slice %83 {offsets = [32, 0], sizes = [32, 16], strides = [1, 1]} : vector<64x16xf32> to vector<32x16xf32>
    %86 = arith.truncf %62 : vector<32x16xf32> to vector<32x16xbf16>
    %c1_76 = arith.constant 1 : index
    %c0_77 = arith.constant 0 : index
    %c0_78 = arith.constant 0 : index
    %c0_79 = arith.constant 0 : index
    %87 = vector.load %arg6[%c1_76, %c0_77, %c0_78, %c0_79] : memref<3x3x16x32xbf16, #tpu.memory_space<vmem>>, vector<1x1x16x32xbf16>
    %88 = vector.shape_cast %87 : vector<1x1x16x32xbf16> to vector<16x32xbf16>
    %cst_80 = arith.constant dense<0.000000e+00> : vector<32x32xf32>
    %89 = tpu.matmul %86, %88, %cst_80 {dimension_numbers = #tpu.dot_dimension_numbers<[1], [0], [0], [1], [0, 0, 1, 1], [], []>} : vector<32x16xbf16>, vector<16x32xbf16>, vector<32x32xf32> -> vector<32x32xf32>
    %90 = arith.truncf %84 : vector<32x16xf32> to vector<32x16xbf16>
    %c1_81 = arith.constant 1 : index
    %c1_82 = arith.constant 1 : index
    %c0_83 = arith.constant 0 : index
    %c0_84 = arith.constant 0 : index
    %91 = vector.load %arg6[%c1_81, %c1_82, %c0_83, %c0_84] : memref<3x3x16x32xbf16, #tpu.memory_space<vmem>>, vector<1x1x16x32xbf16>
    %92 = vector.shape_cast %91 : vector<1x1x16x32xbf16> to vector<16x32xbf16>
    %cst_85 = arith.constant dense<0.000000e+00> : vector<32x32xf32>
    %93 = tpu.matmul %90, %92, %cst_85 {dimension_numbers = #tpu.dot_dimension_numbers<[1], [0], [0], [1], [0, 0, 1, 1], [], []>} : vector<32x16xbf16>, vector<16x32xbf16>, vector<32x32xf32> -> vector<32x32xf32>
    %94 = arith.addf %89, %93 : vector<32x32xf32>
    %95 = arith.truncf %85 : vector<32x16xf32> to vector<32x16xbf16>
    %c1_86 = arith.constant 1 : index
    %c2_87 = arith.constant 2 : index
    %c0_88 = arith.constant 0 : index
    %c0_89 = arith.constant 0 : index
    %96 = vector.load %arg6[%c1_86, %c2_87, %c0_88, %c0_89] : memref<3x3x16x32xbf16, #tpu.memory_space<vmem>>, vector<1x1x16x32xbf16>
    %97 = vector.shape_cast %96 : vector<1x1x16x32xbf16> to vector<16x32xbf16>
    %cst_90 = arith.constant dense<0.000000e+00> : vector<32x32xf32>
    %98 = tpu.matmul %95, %97, %cst_90 {dimension_numbers = #tpu.dot_dimension_numbers<[1], [0], [0], [1], [0, 0, 1, 1], [], []>} : vector<32x16xbf16>, vector<16x32xbf16>, vector<32x32xf32> -> vector<32x32xf32>
    %99 = arith.addf %94, %98 : vector<32x32xf32>
    %100 = arith.addf %99, %52 : vector<32x32xf32>
    %cst_91 = arith.constant 0.000000e+00 : f32
    %101 = vector.broadcast %cst_91 : f32 to vector<32x32xf32>
    %102 = arith.maximumf %100, %101 : vector<32x32xf32>
    %103 = arith.truncf %102 : vector<32x32xf32> to vector<32x32xbf16>
    %c2_92 = arith.constant 2 : index
    %c0_93 = arith.constant 0 : index
    %c0_94 = arith.constant 0 : index
    %104 = vector.load %arg3[%c2_92, %c0_93, %c0_94] : memref<3x32x16xbf16, #tpu.memory_space<vmem>>, vector<1x32x16xbf16>
    %105 = vector.shape_cast %104 : vector<1x32x16xbf16> to vector<32x16xbf16>
    %cst_95 = arith.constant dense<0.000000e+00> : vector<32x16xf32>
    %106 = tpu.matmul %103, %105, %cst_95 {dimension_numbers = #tpu.dot_dimension_numbers<[1], [0], [0], [1], [0, 0, 1, 1], [], []>} : vector<32x32xbf16>, vector<32x16xbf16>, vector<32x16xf32> -> vector<32x16xf32>
    %c2_96 = arith.constant 2 : index
    %c0_97 = arith.constant 0 : index
    %c0_98 = arith.constant 0 : index
    %107 = vector.load %arg4[%c2_96, %c0_97, %c0_98] : memref<3x1x16xf32, #tpu.memory_space<vmem>>, vector<1x1x16xf32>
    %108 = vector.shape_cast %107 : vector<1x1x16xf32> to vector<1x16xf32>
    %109 = vector.broadcast %108 : vector<1x16xf32> to vector<32x16xf32>
    %110 = arith.addf %106, %109 : vector<32x16xf32>
    %cst_99 = arith.constant 0.000000e+00 : f32
    %111 = vector.broadcast %cst_99 : f32 to vector<32x16xf32>
    %112 = arith.maximumf %110, %111 : vector<32x16xf32>
    %113 = vector.extract_strided_slice %103 {offsets = [0, 0], sizes = [16, 32], strides = [1, 1]} : vector<32x32xbf16> to vector<16x32xbf16>
    %c2_100 = arith.constant 2 : index
    %c0_101 = arith.constant 0 : index
    %c0_102 = arith.constant 0 : index
    %c0_103 = arith.constant 0 : index
    %114 = vector.load %arg5[%c2_100, %c0_101, %c0_102, %c0_103] : memref<3x4x32x16xbf16, #tpu.memory_space<vmem>>, vector<1x1x32x16xbf16>
    %115 = vector.shape_cast %114 : vector<1x1x32x16xbf16> to vector<32x16xbf16>
    %cst_104 = arith.constant dense<0.000000e+00> : vector<16x16xf32>
    %116 = tpu.matmul %113, %115, %cst_104 {dimension_numbers = #tpu.dot_dimension_numbers<[1], [0], [0], [1], [0, 0, 1, 1], [], []>} : vector<16x32xbf16>, vector<32x16xbf16>, vector<16x16xf32> -> vector<16x16xf32>
    %117 = vector.extract_strided_slice %103 {offsets = [16, 0], sizes = [16, 32], strides = [1, 1]} : vector<32x32xbf16> to vector<16x32xbf16>
    %c2_105 = arith.constant 2 : index
    %c1_106 = arith.constant 1 : index
    %c0_107 = arith.constant 0 : index
    %c0_108 = arith.constant 0 : index
    %118 = vector.load %arg5[%c2_105, %c1_106, %c0_107, %c0_108] : memref<3x4x32x16xbf16, #tpu.memory_space<vmem>>, vector<1x1x32x16xbf16>
    %119 = vector.shape_cast %118 : vector<1x1x32x16xbf16> to vector<32x16xbf16>
    %cst_109 = arith.constant dense<0.000000e+00> : vector<16x16xf32>
    %120 = tpu.matmul %117, %119, %cst_109 {dimension_numbers = #tpu.dot_dimension_numbers<[1], [0], [0], [1], [0, 0, 1, 1], [], []>} : vector<16x32xbf16>, vector<32x16xbf16>, vector<16x16xf32> -> vector<16x16xf32>
    %121 = vector.extract_strided_slice %103 {offsets = [0, 0], sizes = [16, 32], strides = [1, 1]} : vector<32x32xbf16> to vector<16x32xbf16>
    %c2_110 = arith.constant 2 : index
    %c2_111 = arith.constant 2 : index
    %c0_112 = arith.constant 0 : index
    %c0_113 = arith.constant 0 : index
    %122 = vector.load %arg5[%c2_110, %c2_111, %c0_112, %c0_113] : memref<3x4x32x16xbf16, #tpu.memory_space<vmem>>, vector<1x1x32x16xbf16>
    %123 = vector.shape_cast %122 : vector<1x1x32x16xbf16> to vector<32x16xbf16>
    %cst_114 = arith.constant dense<0.000000e+00> : vector<16x16xf32>
    %124 = tpu.matmul %121, %123, %cst_114 {dimension_numbers = #tpu.dot_dimension_numbers<[1], [0], [0], [1], [0, 0, 1, 1], [], []>} : vector<16x32xbf16>, vector<32x16xbf16>, vector<16x16xf32> -> vector<16x16xf32>
    %125 = vector.extract_strided_slice %103 {offsets = [16, 0], sizes = [16, 32], strides = [1, 1]} : vector<32x32xbf16> to vector<16x32xbf16>
    %c2_115 = arith.constant 2 : index
    %c3_116 = arith.constant 3 : index
    %c0_117 = arith.constant 0 : index
    %c0_118 = arith.constant 0 : index
    %126 = vector.load %arg5[%c2_115, %c3_116, %c0_117, %c0_118] : memref<3x4x32x16xbf16, #tpu.memory_space<vmem>>, vector<1x1x32x16xbf16>
    %127 = vector.shape_cast %126 : vector<1x1x32x16xbf16> to vector<32x16xbf16>
    %cst_119 = arith.constant dense<0.000000e+00> : vector<16x16xf32>
    %128 = tpu.matmul %125, %127, %cst_119 {dimension_numbers = #tpu.dot_dimension_numbers<[1], [0], [0], [1], [0, 0, 1, 1], [], []>} : vector<16x32xbf16>, vector<32x16xbf16>, vector<16x16xf32> -> vector<16x16xf32>
    %129 = tpu.concatenate %116, %120, %124, %128 in 0 : vector<16x16xf32>, vector<16x16xf32>, vector<16x16xf32>, vector<16x16xf32> -> vector<64x16xf32>
    %130 = arith.truncf %129 : vector<64x16xf32> to vector<64x16xbf16>
    %cst_120 = arith.constant dense<0.000000e+00> : vector<64x16xf32>
    %131 = tpu.matmul %2, %130, %cst_120 {dimension_numbers = #tpu.dot_dimension_numbers<[1], [0], [0], [1], [0, 0, 1, 1], [], []>} : vector<64x64xbf16>, vector<64x16xbf16>, vector<64x16xf32> -> vector<64x16xf32>
    %cst_121 = arith.constant 0.000000e+00 : f32
    %132 = vector.broadcast %cst_121 : f32 to vector<64x16xf32>
    %133 = arith.maximumf %131, %132 : vector<64x16xf32>
    %134 = vector.extract_strided_slice %133 {offsets = [0, 0], sizes = [32, 16], strides = [1, 1]} : vector<64x16xf32> to vector<32x16xf32>
    %135 = vector.extract_strided_slice %133 {offsets = [32, 0], sizes = [32, 16], strides = [1, 1]} : vector<64x16xf32> to vector<32x16xf32>
    %136 = arith.truncf %112 : vector<32x16xf32> to vector<32x16xbf16>
    %c2_122 = arith.constant 2 : index
    %c0_123 = arith.constant 0 : index
    %c0_124 = arith.constant 0 : index
    %c0_125 = arith.constant 0 : index
    %137 = vector.load %arg6[%c2_122, %c0_123, %c0_124, %c0_125] : memref<3x3x16x32xbf16, #tpu.memory_space<vmem>>, vector<1x1x16x32xbf16>
    %138 = vector.shape_cast %137 : vector<1x1x16x32xbf16> to vector<16x32xbf16>
    %cst_126 = arith.constant dense<0.000000e+00> : vector<32x32xf32>
    %139 = tpu.matmul %136, %138, %cst_126 {dimension_numbers = #tpu.dot_dimension_numbers<[1], [0], [0], [1], [0, 0, 1, 1], [], []>} : vector<32x16xbf16>, vector<16x32xbf16>, vector<32x32xf32> -> vector<32x32xf32>
    %140 = arith.truncf %134 : vector<32x16xf32> to vector<32x16xbf16>
    %c2_127 = arith.constant 2 : index
    %c1_128 = arith.constant 1 : index
    %c0_129 = arith.constant 0 : index
    %c0_130 = arith.constant 0 : index
    %141 = vector.load %arg6[%c2_127, %c1_128, %c0_129, %c0_130] : memref<3x3x16x32xbf16, #tpu.memory_space<vmem>>, vector<1x1x16x32xbf16>
    %142 = vector.shape_cast %141 : vector<1x1x16x32xbf16> to vector<16x32xbf16>
    %cst_131 = arith.constant dense<0.000000e+00> : vector<32x32xf32>
    %143 = tpu.matmul %140, %142, %cst_131 {dimension_numbers = #tpu.dot_dimension_numbers<[1], [0], [0], [1], [0, 0, 1, 1], [], []>} : vector<32x16xbf16>, vector<16x32xbf16>, vector<32x32xf32> -> vector<32x32xf32>
    %144 = arith.addf %139, %143 : vector<32x32xf32>
    %145 = arith.truncf %135 : vector<32x16xf32> to vector<32x16xbf16>
    %c2_132 = arith.constant 2 : index
    %c2_133 = arith.constant 2 : index
    %c0_134 = arith.constant 0 : index
    %c0_135 = arith.constant 0 : index
    %146 = vector.load %arg6[%c2_132, %c2_133, %c0_134, %c0_135] : memref<3x3x16x32xbf16, #tpu.memory_space<vmem>>, vector<1x1x16x32xbf16>
    %147 = vector.shape_cast %146 : vector<1x1x16x32xbf16> to vector<16x32xbf16>
    %cst_136 = arith.constant dense<0.000000e+00> : vector<32x32xf32>
    %148 = tpu.matmul %145, %147, %cst_136 {dimension_numbers = #tpu.dot_dimension_numbers<[1], [0], [0], [1], [0, 0, 1, 1], [], []>} : vector<32x16xbf16>, vector<16x32xbf16>, vector<32x32xf32> -> vector<32x32xf32>
    %149 = arith.addf %144, %148 : vector<32x32xf32>
    %150 = arith.addf %149, %102 : vector<32x32xf32>
    %cst_137 = arith.constant 0.000000e+00 : f32
    %151 = vector.broadcast %cst_137 : f32 to vector<32x32xf32>
    %152 = arith.maximumf %150, %151 : vector<32x32xf32>
    %c0_138 = arith.constant 0 : index
    %c0_139 = arith.constant 0 : index
    %153 = vector.load %arg7[%c0_138, %c0_139] : memref<32x32xf32, #tpu.memory_space<vmem>>, vector<32x32xf32>
    tpu.vector_store %arg7[%c0_138, %c0_139], %152 {strides = array<i32>} : memref<32x32xf32, #tpu.memory_space<vmem>>, vector<32x32xf32>,
    return
  }
  func.func @transform_0(%arg0: i32) -> (i32, i32, i32) {
    %c0_i32 = arith.constant 0 : i32
    %c0_i32_0 = arith.constant 0 : i32
    %c0_i32_1 = arith.constant 0 : i32
    %c0_i32_2 = arith.constant 0 : i32
    return %c0_i32, %c0_i32_0, %c0_i32_1 : i32, i32, i32
  }
  func.func @transform_1(%arg0: i32) -> (i32, i32) {
    %c0_i32 = arith.constant 0 : i32
    %c0_i32_0 = arith.constant 0 : i32
    %c0_i32_1 = arith.constant 0 : i32
    return %c0_i32, %c0_i32_0 : i32, i32
  }
  func.func @transform_2(%arg0: i32) -> (i32, i32, i32) {
    %c0_i32 = arith.constant 0 : i32
    %c0_i32_0 = arith.constant 0 : i32
    %c0_i32_1 = arith.constant 0 : i32
    %c0_i32_2 = arith.constant 0 : i32
    return %c0_i32, %c0_i32_0, %c0_i32_1 : i32, i32, i32
  }
  func.func @transform_3(%arg0: i32) -> (i32, i32, i32) {
    %c0_i32 = arith.constant 0 : i32
    %c0_i32_0 = arith.constant 0 : i32
    %c0_i32_1 = arith.constant 0 : i32
    %c0_i32_2 = arith.constant 0 : i32
    return %c0_i32, %c0_i32_0, %c0_i32_1 : i32, i32, i32
  }
  func.func @transform_4(%arg0: i32) -> (i32, i32, i32, i32) {
    %c0_i32 = arith.constant 0 : i32
    %c0_i32_0 = arith.constant 0 : i32
    %c0_i32_1 = arith.constant 0 : i32
    %c0_i32_2 = arith.constant 0 : i32
    %c0_i32_3 = arith.constant 0 : i32
    return %c0_i32, %c0_i32_0, %c0_i32_1, %c0_i32_2 : i32, i32, i32, i32
  }
  func.func @transform_5(%arg0: i32) -> (i32, i32, i32, i32) {
    %c0_i32 = arith.constant 0 : i32
    %c0_i32_0 = arith.constant 0 : i32
    %c0_i32_1 = arith.constant 0 : i32
    %c0_i32_2 = arith.constant 0 : i32
    %c0_i32_3 = arith.constant 0 : i32
    return %c0_i32, %c0_i32_0, %c0_i32_1, %c0_i32_2 : i32, i32, i32, i32
  }
  func.func @transform_6(%arg0: i32) -> (i32, i32) {
    %c0_i32 = arith.constant 0 : i32
    %c0_i32_0 = arith.constant 0 : i32
    %c0_i32_1 = arith.constant 0 : i32
    return %c0_i32, %c0_i32_0 : i32, i32
  }
}

</mosaic_0001>

<llo_original>
// kernel: tpu_custom_call.1
$region0: #{tpu_custom_call.1}
  #allocation0 [shape = 'u32[]', space=smem, size = 0x4, offset = 0x4, fixed_abs, tag = 'smem constant byte address 0x4 - core index']
  #allocation1 [shape = 'u32[144,128]{1,0:T(1,128)}', space=vmem, size = 0x12000, scoped, tag = 'internal scratch']
  %s0 = inlined_call_operand.vmem [shape: f32[2,16,32], index: 0, kind: input, shape index: {}]
  %s1 = inlined_call_operand.vmem [shape: bf16[64,64], index: 1, kind: input, shape index: {}]
  %s2 = inlined_call_operand.vmem [shape: bf16[3,32,16], index: 2, kind: input, shape index: {}]
  %s3 = inlined_call_operand.vmem [shape: f32[3,1,16], index: 3, kind: input, shape index: {}]
  %s4 = inlined_call_operand.vmem [shape: bf16[3,4,32,16], index: 4, kind: input, shape index: {}]
  %s5 = inlined_call_operand.vmem [shape: bf16[3,3,16,32], index: 5, kind: input, shape index: {}]
  %s6 = inlined_call_operand.hbm [shape: f32[32,32], index: 6, kind: output, shape index: {}]
  %s7 = sld [smem:[#allocation0]]
  $region34: #{tpu_custom_call.1} parent=0
    _
  %s9 = ssub.s32 1, %s7
  %s10 = scalar_select 0, %s9, %s7
  $region1: #{tpu_custom_call.1} parent=0
    #allocation2 [shape = 'u8[16384]{0}', space=vmem, size = 0x4000, scoped, tag = 'output window, operand 0, single buffered']
    #allocation3 [shape = 's32[1]{0}', space=sflag, size = 0x4, scoped, tag = 'scoped memory for tpu_custom_call.1']
    %11 = vsyncpa [#allocation3], 0
    // Predicated region
    $region2: #{tpu_custom_call.1} parent=1 // pred_check
      _
    $region3: #{tpu_custom_call.1} parent=1 // pred_check_branch
      %13 = sbr.rel (0) target = $region5
    $region4: #{tpu_custom_call.1} parent=1 // pred_region
      _
    $region5: #{tpu_custom_call.1} parent=1 // pred_fallthru
      _
    // Predicated region
    $region6: #{tpu_custom_call.1} parent=1 // pred_check
      _
    $region7: #{tpu_custom_call.1} parent=1 // pred_check_branch
      %15 = sbr.rel (0) target = $region9
    $region8: #{tpu_custom_call.1} parent=1 // pred_region
      _
    $region9: #{tpu_custom_call.1} parent=1 // pred_fallthru
      _
    // Predicated region
    $region10: #{tpu_custom_call.1} parent=1 // pred_check
      _
    $region11: #{tpu_custom_call.1} parent=1 // pred_check_branch
      %17 = sbr.rel (0) target = $region13
    $region12: #{tpu_custom_call.1} parent=1 // pred_region
      _
    $region13: #{tpu_custom_call.1} parent=1 // pred_fallthru
      _
    // Predicated region
    $region14: #{tpu_custom_call.1} parent=1 // pred_check
      _
    $region15: #{tpu_custom_call.1} parent=1 // pred_check_branch
      %19 = sbr.rel (0) target = $region17
    $region16: #{tpu_custom_call.1} parent=1 // pred_region
      _
    $region17: #{tpu_custom_call.1} parent=1 // pred_fallthru
      _
    // Predicated region
    $region18: #{tpu_custom_call.1} parent=1 // pred_check
      _
    $region19: #{tpu_custom_call.1} parent=1 // pred_check_branch
      %21 = sbr.rel (0) target = $region21
    $region20: #{tpu_custom_call.1} parent=1 // pred_region
      _
    $region21: #{tpu_custom_call.1} parent=1 // pred_fallthru
      _
    // Predicated region
    $region22: #{tpu_custom_call.1} parent=1 // pred_check
      _
    $region23: #{tpu_custom_call.1} parent=1 // pred_check_branch
      %23 = sbr.rel (0) target = $region25
    $region24: #{tpu_custom_call.1} parent=1 // pred_region
      _
    $region25: #{tpu_custom_call.1} parent=1 // pred_fallthru
      _
    %v25 = vld [vmem:[%s0] sm:$0xff]
    %v26 = vld [vmem:[%s0 + $0x8] sm:$0xff]
    %v27 = vld [vmem:[%s0 + $0x10] sm:$0xff]
    %v28 = vld [vmem:[%s0 + $0x18] sm:$0xff]
    %v29 = vld [vmem:[%s1] sm:$0xf]
    %v30 = vld [vmem:[%s1 + $0x4] sm:$0xf]
    %v31 = vld [vmem:[%s1 + $0x8] sm:$0xf]
    %v32 = vld [vmem:[%s1 + $0xc] sm:$0xf]
    %v33 = vld [vmem:[%s1 + $0x10] sm:$0xf]
    %v34 = vld [vmem:[%s1 + $0x14] sm:$0xf]
    %v35 = vld [vmem:[%s1 + $0x18] sm:$0xf]
    %v36 = vld [vmem:[%s1 + $0x1c] sm:$0xf]
    %v37 = vpack.c.bf16 %v26, %v25
    %v38 = vpack.c.bf16 %v28, %v27
    %v39 = vld [vmem:[%s2] sm:$0xf]
    %v40 = vld [vmem:[%s2 + $0x4] sm:$0xf]
    %v41 = vld [vmem:[%s2 + $0x8] sm:$0xf]
    %v42 = vld [vmem:[%s2 + $0xc] sm:$0xf]
    %v43 = vld [vmem:[%s3] sm:$0x1]
    %v45 = vlaneseq
    %v46 = vshrl.u32 %v45, 7
    %v47 = vsub.s32 0, %v46
    %v48 = vrot.slane %v43, %v47
    %v54 = vunpack.c.l.b16 %v39
    %v55 = vunpack.c.l.b16 %v40
    %v56 = vunpack.c.l.b16 %v41
    %v57 = vunpack.c.l.b16 %v42
    %v58 = vpack.c.b16 %v55, %v54
    %v59 = vpack.c.b16 %v57, %v56
    %vm62 = vcmask 261120
    %v64 = vsel %vm62, %v37, 0
    %v67 = vsel %vm62, %v38, 0
    %69 = vmatprep.subr.bf16.mxu0 0
    %70 = vmatpush1.bf16.msra.mxu0 %v58
    %71 = vmatprep.subr.bf16.mxu0 0
    %72 = vmatpush1.bf16.msra.mxu0 %v59
    %73 = vmatprep.subr.bf16.mxu0 0
    %74 = vmatpush1.bf16.msra.mxu0 0
    %75 = vmatprep.subr.bf16.mxu0 0
    %76 = vmatpush1.bf16.msra.mxu0 0
    %77 = vmatprep.subr.bf16.mxu0 0
    %78 = vmatpush1.bf16.msra.mxu0 0
    %79 = vmatprep.subr.bf16.mxu0 0
    %80 = vmatpush1.bf16.msra.mxu0 0
    %81 = vmatprep.subr.bf16.mxu0 0
    %82 = vmatpush1.bf16.msra.mxu0 0
    %83 = vmatprep.subr.bf16.mxu0 0
    %84 = vmatpush1.bf16.msra.mxu0 0
    %85 = vmatprep.subr.bf16.mxu0 0
    %86 = vmatpush1.bf16.msra.mxu0 0
    %87 = vmatprep.subr.bf16.mxu0 0
    %88 = vmatpush1.bf16.msra.mxu0 0
    %89 = vmatprep.subr.bf16.mxu0 0
    %90 = vmatpush1.bf16.msra.mxu0 0
    %91 = vmatprep.subr.bf16.mxu0 0
    %92 = vmatpush1.bf16.msra.mxu0 0
    %93 = vmatprep.subr.bf16.mxu0 0
    %94 = vmatpush1.bf16.msra.mxu0 0
    %95 = vmatprep.subr.bf16.mxu0 0
    %96 = vmatpush1.bf16.msra.mxu0 0
    %97 = vmatprep.subr.bf16.mxu0 0
    %98 = vmatpush1.bf16.msra.mxu0 0
    %99 = vmatprep.subr.bf16.mxu0 0
    %100 = vmatpush1.bf16.msra.mxu0 0
    %101 = vmatprep.mubr.bf16.mxu0 0
    %102 = vmatmul.mubr.bf16.gmra.mrb[0].mxu0 %v64
    %v103 = vpop.f32.mrb[0].mxu0
    %v104 = vadd.f32 %v48, %v103
    %v105 = vpop.f32.mrb[0].mxu0
    %v106 = vpop.f32.mrb[0].mxu0
    %v107 = vadd.f32 %v48, %v106
    %v108 = vpop.f32.mrb[0].mxu0
    %109 = vmatprep.mubr.bf16.mxu0 0
    %110 = vmatmul.mubr.bf16.gmra.mrb[0].mxu0 %v67
    %v111 = vpop.f32.mrb[0].mxu0
    %v112 = vadd.f32 %v48, %v111
    %v113 = vpop.f32.mrb[0].mxu0
    %v114 = vpop.f32.mrb[0].mxu0
    %v115 = vadd.f32 %v48, %v114
    %v116 = vpop.f32.mrb[0].mxu0
    %117 = vdwg.mxu0
    %v118 = vmax.f32 %v104, 0.0
    %v119 = vmax.f32 %v107, 0.0
    %v120 = vmax.f32 %v112, 0.0
    %v121 = vmax.f32 %v115, 0.0
    %v122 = vld [vmem:[%s4] sm:$0xf]
    %v123 = vld [vmem:[%s4 + $0x4] sm:$0xf]
    %v124 = vld [vmem:[%s4 + $0x8] sm:$0xf]
    %v125 = vld [vmem:[%s4 + $0xc] sm:$0xf]
    %v130 = vunpack.c.l.b16 %v122
    %v131 = vunpack.c.l.b16 %v123
    %v132 = vunpack.c.l.b16 %v124
    %v133 = vunpack.c.l.b16 %v125
    %v134 = vpack.c.b16 %v131, %v130
    %v135 = vpack.c.b16 %v133, %v132
    %138 = vmatprep.subr.bf16.mxu0 0
    %139 = vmatpush1.bf16.msra.mxu0 %v134
    %140 = vmatprep.subr.bf16.mxu0 0
    %141 = vmatpush1.bf16.msra.mxu0 %v135
    %142 = vmatprep.subr.bf16.mxu0 0
    %143 = vmatpush1.bf16.msra.mxu0 0
    %144 = vmatprep.subr.bf16.mxu0 0
    %145 = vmatpush1.bf16.msra.mxu0 0
    %146 = vmatprep.subr.bf16.mxu0 0
    %147 = vmatpush1.bf16.msra.mxu0 0
    %148 = vmatprep.subr.bf16.mxu0 0
    %149 = vmatpush1.bf16.msra.mxu0 0
    %150 = vmatprep.subr.bf16.mxu0 0
    %151 = vmatpush1.bf16.msra.mxu0 0
    %152 = vmatprep.subr.bf16.mxu0 0
    %153 = vmatpush1.bf16.msra.mxu0 0
    %154 = vmatprep.subr.bf16.mxu0 0
    %155 = vmatpush1.bf16.msra.mxu0 0
    %156 = vmatprep.subr.bf16.mxu0 0
    %157 = vmatpush1.bf16.msra.mxu0 0
    %158 = vmatprep.subr.bf16.mxu0 0
    %159 = vmatpush1.bf16.msra.mxu0 0
    %160 = vmatprep.subr.bf16.mxu0 0
    %161 = vmatpush1.bf16.msra.mxu0 0
    %162 = vmatprep.subr.bf16.mxu0 0
    %163 = vmatpush1.bf16.msra.mxu0 0
    %164 = vmatprep.subr.bf16.mxu0 0
    %165 = vmatpush1.bf16.msra.mxu0 0
    %166 = vmatprep.subr.bf16.mxu0 0
    %167 = vmatpush1.bf16.msra.mxu0 0
    %168 = vmatprep.subr.bf16.mxu0 0
    %169 = vmatpush1.bf16.msra.mxu0 0
    %170 = vmatprep.mubr.bf16.mxu0 0
    %171 = vmatmul.mubr.bf16.gmra.mrb[0].mxu0 %v64
    %v172 = vpop.f32.mrb[0].mxu0
    %v173 = vadd.f32 0.0, %v172
    %v174 = vpop.f32.mrb[0].mxu0
    %v175 = vpop.f32.mrb[0].mxu0
    %v176 = vadd.f32 0.0, %v175
    %v177 = vpop.f32.mrb[0].mxu0
    %178 = vdwg.mxu0
    %s179 = scalar_lea.vmem %s4, 16
    %v180 = vld [vmem:[%s179] sm:$0xf]
    %v181 = vld [vmem:[%s179 + $0x4] sm:$0xf]
    %v182 = vld [vmem:[%s179 + $0x8] sm:$0xf]
    %v183 = vld [vmem:[%s179 + $0xc] sm:$0xf]
    %v188 = vunpack.c.l.b16 %v180
    %v189 = vunpack.c.l.b16 %v181
    %v190 = vunpack.c.l.b16 %v182
    %v191 = vunpack.c.l.b16 %v183
    %v192 = vpack.c.b16 %v189, %v188
    %v193 = vpack.c.b16 %v191, %v190
    %196 = vmatprep.subr.bf16.mxu0 0
    %197 = vmatpush1.bf16.msra.mxu0 %v192
    %198 = vmatprep.subr.bf16.mxu0 0
    %199 = vmatpush1.bf16.msra.mxu0 %v193
    %200 = vmatprep.subr.bf16.mxu0 0
    %201 = vmatpush1.bf16.msra.mxu0 0
    %202 = vmatprep.subr.bf16.mxu0 0
    %203 = vmatpush1.bf16.msra.mxu0 0
    %204 = vmatprep.subr.bf16.mxu0 0
    %205 = vmatpush1.bf16.msra.mxu0 0
    %206 = vmatprep.subr.bf16.mxu0 0
    %207 = vmatpush1.bf16.msra.mxu0 0
    %208 = vmatprep.subr.bf16.mxu0 0
    %209 = vmatpush1.bf16.msra.mxu0 0
    %210 = vmatprep.subr.bf16.mxu0 0
    %211 = vmatpush1.bf16.msra.mxu0 0
    %212 = vmatprep.subr.bf16.mxu0 0
    %213 = vmatpush1.bf16.msra.mxu0 0
    %214 = vmatprep.subr.bf16.mxu0 0
    %215 = vmatpush1.bf16.msra.mxu0 0
    %216 = vmatprep.subr.bf16.mxu0 0
    %217 = vmatpush1.bf16.msra.mxu0 0
    %218 = vmatprep.subr.bf16.mxu0 0
    %219 = vmatpush1.bf16.msra.mxu0 0
    %220 = vmatprep.subr.bf16.mxu0 0
    %221 = vmatpush1.bf16.msra.mxu0 0
    %222 = vmatprep.subr.bf16.mxu0 0
    %223 = vmatpush1.bf16.msra.mxu0 0
    %224 = vmatprep.subr.bf16.mxu0 0
    %225 = vmatpush1.bf16.msra.mxu0 0
    %226 = vmatprep.subr.bf16.mxu0 0
    %227 = vmatpush1.bf16.msra.mxu0 0
    %228 = vmatprep.mubr.bf16.mxu0 0
    %229 = vmatmul.mubr.bf16.gmra.mrb[0].mxu0 %v67
    %v230 = vpop.f32.mrb[0].mxu0
    %v231 = vadd.f32 0.0, %v230
    %v232 = vpop.f32.mrb[0].mxu0
    %v233 = vpop.f32.mrb[0].mxu0
    %v234 = vadd.f32 0.0, %v233
    %v235 = vpop.f32.mrb[0].mxu0
    %236 = vdwg.mxu0
    %s237 = scalar_lea.vmem %s4, 32
    %v238 = vld [vmem:[%s237] sm:$0xf]
    %v239 = vld [vmem:[%s237 + $0x4] sm:$0xf]
    %v240 = vld [vmem:[%s237 + $0x8] sm:$0xf]
    %v241 = vld [vmem:[%s237 + $0xc] sm:$0xf]
    %v246 = vunpack.c.l.b16 %v238
    %v247 = vunpack.c.l.b16 %v239
    %v248 = vunpack.c.l.b16 %v240
    %v249 = vunpack.c.l.b16 %v241
    %v250 = vpack.c.b16 %v247, %v246
    %v251 = vpack.c.b16 %v249, %v248
    %254 = vmatprep.subr.bf16.mxu0 0
    %255 = vmatpush1.bf16.msra.mxu0 %v250
    %256 = vmatprep.subr.bf16.mxu0 0
    %257 = vmatpush1.bf16.msra.mxu0 %v251
    %258 = vmatprep.subr.bf16.mxu0 0
    %259 = vmatpush1.bf16.msra.mxu0 0
    %260 = vmatprep.subr.bf16.mxu0 0
    %261 = vmatpush1.bf16.msra.mxu0 0
    %262 = vmatprep.subr.bf16.mxu0 0
    %263 = vmatpush1.bf16.msra.mxu0 0
    %264 = vmatprep.subr.bf16.mxu0 0
    %265 = vmatpush1.bf16.msra.mxu0 0
    %266 = vmatprep.subr.bf16.mxu0 0
    %267 = vmatpush1.bf16.msra.mxu0 0
    %268 = vmatprep.subr.bf16.mxu0 0
    %269 = vmatpush1.bf16.msra.mxu0 0
    %270 = vmatprep.subr.bf16.mxu0 0
    %271 = vmatpush1.bf16.msra.mxu0 0
    %272 = vmatprep.subr.bf16.mxu0 0
    %273 = vmatpush1.bf16.msra.mxu0 0
    %274 = vmatprep.subr.bf16.mxu0 0
    %275 = vmatpush1.bf16.msra.mxu0 0
    %276 = vmatprep.subr.bf16.mxu0 0
    %277 = vmatpush1.bf16.msra.mxu0 0
    %278 = vmatprep.subr.bf16.mxu0 0
    %279 = vmatpush1.bf16.msra.mxu0 0
    %280 = vmatprep.subr.bf16.mxu0 0
    %281 = vmatpush1.bf16.msra.mxu0 0
    %282 = vmatprep.subr.bf16.mxu0 0
    %283 = vmatpush1.bf16.msra.mxu0 0
    %284 = vmatprep.subr.bf16.mxu0 0
    %285 = vmatpush1.bf16.msra.mxu0 0
    %286 = vmatprep.mubr.bf16.mxu0 0
    %287 = vmatmul.mubr.bf16.gmra.mrb[0].mxu0 %v64
    %v288 = vpop.f32.mrb[0].mxu0
    %v289 = vadd.f32 0.0, %v288
    %v290 = vpop.f32.mrb[0].mxu0
    %v291 = vpop.f32.mrb[0].mxu0
    %v292 = vadd.f32 0.0, %v291
    %v293 = vpop.f32.mrb[0].mxu0
    %294 = vdwg.mxu0
    %s295 = scalar_lea.vmem %s4, 48
    %v296 = vld [vmem:[%s295] sm:$0xf]
    %v297 = vld [vmem:[%s295 + $0x4] sm:$0xf]
    %v298 = vld [vmem:[%s295 + $0x8] sm:$0xf]
    %v299 = vld [vmem:[%s295 + $0xc] sm:$0xf]
    %v304 = vunpack.c.l.b16 %v296
    %v305 = vunpack.c.l.b16 %v297
    %v306 = vunpack.c.l.b16 %v298
    %v307 = vunpack.c.l.b16 %v299
    %v308 = vpack.c.b16 %v305, %v304
    %v309 = vpack.c.b16 %v307, %v306
    %312 = vmatprep.subr.bf16.mxu0 0
    %313 = vmatpush1.bf16.msra.mxu0 %v308
    %314 = vmatprep.subr.bf16.mxu0 0
    %315 = vmatpush1.bf16.msra.mxu0 %v309
    %316 = vmatprep.subr.bf16.mxu0 0
    %317 = vmatpush1.bf16.msra.mxu0 0
    %318 = vmatprep.subr.bf16.mxu0 0
    %319 = vmatpush1.bf16.msra.mxu0 0
    %320 = vmatprep.subr.bf16.mxu0 0
    %321 = vmatpush1.bf16.msra.mxu0 0
    %322 = vmatprep.subr.bf16.mxu0 0
    %323 = vmatpush1.bf16.msra.mxu0 0
    %324 = vmatprep.subr.bf16.mxu0 0
    %325 = vmatpush1.bf16.msra.mxu0 0
    %326 = vmatprep.subr.bf16.mxu0 0
    %327 = vmatpush1.bf16.msra.mxu0 0
    %328 = vmatprep.subr.bf16.mxu0 0
    %329 = vmatpush1.bf16.msra.mxu0 0
    %330 = vmatprep.subr.bf16.mxu0 0
    %331 = vmatpush1.bf16.msra.mxu0 0
    %332 = vmatprep.subr.bf16.mxu0 0
    %333 = vmatpush1.bf16.msra.mxu0 0
    %334 = vmatprep.subr.bf16.mxu0 0
    %335 = vmatpush1.bf16.msra.mxu0 0
    %336 = vmatprep.subr.bf16.mxu0 0
    %337 = vmatpush1.bf16.msra.mxu0 0
    %338 = vmatprep.subr.bf16.mxu0 0
    %339 = vmatpush1.bf16.msra.mxu0 0
    %340 = vmatprep.subr.bf16.mxu0 0
    %341 = vmatpush1.bf16.msra.mxu0 0
    %342 = vmatprep.subr.bf16.mxu0 0
    %343 = vmatpush1.bf16.msra.mxu0 0
    %344 = vmatprep.mubr.bf16.mxu0 0
    %345 = vmatmul.mubr.bf16.gmra.mrb[0].mxu0 %v67
    %v346 = vpop.f32.mrb[0].mxu0
    %v347 = vadd.f32 0.0, %v346
    %v348 = vpop.f32.mrb[0].mxu0
    %v349 = vpop.f32.mrb[0].mxu0
    %v350 = vadd.f32 0.0, %v349
    %v351 = vpop.f32.mrb[0].mxu0
    %352 = vdwg.mxu0
    %v353 = vpack.c.bf16 %v176, %v173
    %v354 = vpack.c.bf16 %v234, %v231
    %v355 = vpack.c.bf16 %v292, %v289
    %v356 = vpack.c.bf16 %v350, %v347
    %v365 = vunpack.c.l.b16 %v29
    %v366 = vunpack.c.l.b16 %v30
    %v367 = vunpack.c.l.b16 %v31
    %v368 = vunpack.c.l.b16 %v32
    %v369 = vunpack.c.l.b16 %v33
    %v370 = vunpack.c.l.b16 %v34
    %v371 = vunpack.c.l.b16 %v35
    %v372 = vunpack.c.l.b16 %v36
    %v373 = vpack.c.b16 %v366, %v365
    %v374 = vpack.c.b16 %v368, %v367
    %v375 = vpack.c.b16 %v370, %v369
    %v376 = vpack.c.b16 %v372, %v371
    %vm377 = vcmask 523264
    %v379 = vsel %vm377, %v373, 0
    %v382 = vsel %vm377, %v374, 0
    %v385 = vsel %vm377, %v375, 0
    %v388 = vsel %vm377, %v376, 0
    %390 = vmatprep.subr.bf16.mxu0 0
    %391 = vmatpush1.bf16.msra.mxu0 %v353
    %392 = vmatprep.subr.bf16.mxu0 0
    %393 = vmatpush1.bf16.msra.mxu0 %v354
    %394 = vmatprep.subr.bf16.mxu0 0
    %395 = vmatpush1.bf16.msra.mxu0 %v355
    %396 = vmatprep.subr.bf16.mxu0 0
    %397 = vmatpush1.bf16.msra.mxu0 %v356
    %398 = vmatprep.subr.bf16.mxu0 0
    %399 = vmatpush1.bf16.msra.mxu0 0
    %400 = vmatprep.subr.bf16.mxu0 0
    %401 = vmatpush1.bf16.msra.mxu0 0
    %402 = vmatprep.subr.bf16.mxu0 0
    %403 = vmatpush1.bf16.msra.mxu0 0
    %404 = vmatprep.subr.bf16.mxu0 0
    %405 = vmatpush1.bf16.msra.mxu0 0
    %406 = vmatprep.subr.bf16.mxu0 0
    %407 = vmatpush1.bf16.msra.mxu0 0
    %408 = vmatprep.subr.bf16.mxu0 0
    %409 = vmatpush1.bf16.msra.mxu0 0
    %410 = vmatprep.subr.bf16.mxu0 0
    %411 = vmatpush1.bf16.msra.mxu0 0
    %412 = vmatprep.subr.bf16.mxu0 0
    %413 = vmatpush1.bf16.msra.mxu0 0
    %414 = vmatprep.subr.bf16.mxu0 0
    %415 = vmatpush1.bf16.msra.mxu0 0
    %416 = vmatprep.subr.bf16.mxu0 0
    %417 = vmatpush1.bf16.msra.mxu0 0
    %418 = vmatprep.subr.bf16.mxu0 0
    %419 = vmatpush1.bf16.msra.mxu0 0
    %420 = vmatprep.subr.bf16.mxu0 0
    %421 = vmatpush1.bf16.msra.mxu0 0
    %422 = vmatprep.mubr.bf16.mxu0 0
    %423 = vmatmul.mubr.bf16.gmra.mrb[0].mxu0 %v379
    %v424 = vpop.f32.mrb[0].mxu0
    %v425 = vadd.f32 0.0, %v424
    %v426 = vpop.f32.mrb[0].mxu0
    %v427 = vpop.f32.mrb[0].mxu0
    %v428 = vadd.f32 0.0, %v427
    %v429 = vpop.f32.mrb[0].mxu0
    %430 = vmatprep.mubr.bf16.mxu0 0
    %431 = vmatmul.mubr.bf16.gmra.mrb[0].mxu0 %v382
    %v432 = vpop.f32.mrb[0].mxu0
    %v433 = vadd.f32 0.0, %v432
    %v434 = vpop.f32.mrb[0].mxu0
    %v435 = vpop.f32.mrb[0].mxu0
    %v436 = vadd.f32 0.0, %v435
    %v437 = vpop.f32.mrb[0].mxu0
    %438 = vmatprep.mubr.bf16.mxu0 0
    %439 = vmatmul.mubr.bf16.gmra.mrb[0].mxu0 %v385
    %v440 = vpop.f32.mrb[0].mxu0
    %v441 = vadd.f32 0.0, %v440
    %v442 = vpop.f32.mrb[0].mxu0
    %v443 = vpop.f32.mrb[0].mxu0
    %v444 = vadd.f32 0.0, %v443
    %v445 = vpop.f32.mrb[0].mxu0
    %446 = vmatprep.mubr.bf16.mxu0 0
    %447 = vmatmul.mubr.bf16.gmra.mrb[0].mxu0 %v388
    %v448 = vpop.f32.mrb[0].mxu0
    %v449 = vadd.f32 0.0, %v448
    %v450 = vpop.f32.mrb[0].mxu0
    %v451 = vpop.f32.mrb[0].mxu0
    %v452 = vadd.f32 0.0, %v451
    %v453 = vpop.f32.mrb[0].mxu0
    %454 = vdwg.mxu0
    %v455 = vmax.f32 %v425, 0.0
    %v456 = vmax.f32 %v428, 0.0
    %v457 = vmax.f32 %v433, 0.0
    %v458 = vmax.f32 %v436, 0.0
    %v459 = vmax.f32 %v441, 0.0
    %v460 = vmax.f32 %v444, 0.0
    %v461 = vmax.f32 %v449, 0.0
    %v462 = vmax.f32 %v452, 0.0
    %v463 = vpack.c.bf16 %v119, %v118
    %v464 = vpack.c.bf16 %v121, %v120
    %v465 = vld [vmem:[%s5] sm:$0xf]
    %v466 = vld [vmem:[%s5 + $0x4] sm:$0xf]
    %v467 = vpack.c.bf16 %v456, %v455
    %v468 = vpack.c.bf16 %v458, %v457
    %s469 = scalar_lea.vmem %s5, 8
    %v470 = vld [vmem:[%s469] sm:$0xf]
    %v471 = vld [vmem:[%s469 + $0x4] sm:$0xf]
    %v474 = vunpack.c.l.b16 %v470
    %v475 = vunpack.c.l.b16 %v471
    %v476 = vpack.c.b16 %v475, %v474
    %vm478 = vcmask 130048
    %v480 = vsel %vm478, %v467, 0
    %v483 = vsel %vm478, %v468, 0
    %485 = vmatprep.subr.bf16.mxu0 0
    %486 = vmatpush1.bf16.msra.mxu0 %v476
    %487 = vmatprep.subr.bf16.mxu0 0
    %488 = vmatpush1.bf16.msra.mxu0 0
    %489 = vmatprep.subr.bf16.mxu0 0
    %490 = vmatpush1.bf16.msra.mxu0 0
    %491 = vmatprep.subr.bf16.mxu0 0
    %492 = vmatpush1.bf16.msra.mxu0 0
    %493 = vmatprep.subr.bf16.mxu0 0
    %494 = vmatpush1.bf16.msra.mxu0 0
    %495 = vmatprep.subr.bf16.mxu0 0
    %496 = vmatpush1.bf16.msra.mxu0 0
    %497 = vmatprep.subr.bf16.mxu0 0
    %498 = vmatpush1.bf16.msra.mxu0 0
    %499 = vmatprep.subr.bf16.mxu0 0
    %500 = vmatpush1.bf16.msra.mxu0 0
    %501 = vmatprep.subr.bf16.mxu0 0
    %502 = vmatpush1.bf16.msra.mxu0 0
    %503 = vmatprep.subr.bf16.mxu0 0
    %504 = vmatpush1.bf16.msra.mxu0 0
    %505 = vmatprep.subr.bf16.mxu0 0
    %506 = vmatpush1.bf16.msra.mxu0 0
    %507 = vmatprep.subr.bf16.mxu0 0
    %508 = vmatpush1.bf16.msra.mxu0 0
    %509 = vmatprep.subr.bf16.mxu0 0
    %510 = vmatpush1.bf16.msra.mxu0 0
    %511 = vmatprep.subr.bf16.mxu0 0
    %512 = vmatpush1.bf16.msra.mxu0 0
    %513 = vmatprep.subr.bf16.mxu0 0
    %514 = vmatpush1.bf16.msra.mxu0 0
    %515 = vmatprep.subr.bf16.mxu0 0
    %516 = vmatpush1.bf16.msra.mxu0 0
    %517 = vmatprep.mubr.bf16.mxu0 0
    %518 = vmatmul.mubr.bf16.gmra.mrb[0].mxu0 %v480
    %v519 = vpop.f32.mrb[0].mxu0
    %v520 = vadd.f32 0.0, %v519
    %v521 = vpop.f32.mrb[0].mxu0
    %v522 = vpop.f32.mrb[0].mxu0
    %v523 = vadd.f32 0.0, %v522
    %v524 = vpop.f32.mrb[0].mxu0
    %525 = vmatprep.mubr.bf16.mxu0 0
    %526 = vmatmul.mubr.bf16.gmra.mrb[0].mxu0 %v483
    %v527 = vpop.f32.mrb[0].mxu0
    %v528 = vadd.f32 0.0, %v527
    %v529 = vpop.f32.mrb[0].mxu0
    %v530 = vpop.f32.mrb[0].mxu0
    %v531 = vadd.f32 0.0, %v530
    %v532 = vpop.f32.mrb[0].mxu0
    %533 = vdwg.mxu0
    %v536 = vunpack.c.l.b16 %v465
    %v537 = vunpack.c.l.b16 %v466
    %v538 = vpack.c.b16 %v537, %v536
    %v541 = vsel %vm478, %v463, 0
    %v544 = vsel %vm478, %v464, 0
    %546 = vmatprep.subr.bf16.mxu0 0
    %547 = vmatpush1.bf16.msra.mxu0 %v538
    %548 = vmatprep.subr.bf16.mxu0 0
    %549 = vmatpush1.bf16.msra.mxu0 0
    %550 = vmatprep.subr.bf16.mxu0 0
    %551 = vmatpush1.bf16.msra.mxu0 0
    %552 = vmatprep.subr.bf16.mxu0 0
    %553 = vmatpush1.bf16.msra.mxu0 0
    %554 = vmatprep.subr.bf16.mxu0 0
    %555 = vmatpush1.bf16.msra.mxu0 0
    %556 = vmatprep.subr.bf16.mxu0 0
    %557 = vmatpush1.bf16.msra.mxu0 0
    %558 = vmatprep.subr.bf16.mxu0 0
    %559 = vmatpush1.bf16.msra.mxu0 0
    %560 = vmatprep.subr.bf16.mxu0 0
    %561 = vmatpush1.bf16.msra.mxu0 0
    %562 = vmatprep.subr.bf16.mxu0 0
    %563 = vmatpush1.bf16.msra.mxu0 0
    %564 = vmatprep.subr.bf16.mxu0 0
    %565 = vmatpush1.bf16.msra.mxu0 0
    %566 = vmatprep.subr.bf16.mxu0 0
    %567 = vmatpush1.bf16.msra.mxu0 0
    %568 = vmatprep.subr.bf16.mxu0 0
    %569 = vmatpush1.bf16.msra.mxu0 0
    %570 = vmatprep.subr.bf16.mxu0 0
    %571 = vmatpush1.bf16.msra.mxu0 0
    %572 = vmatprep.subr.bf16.mxu0 0
    %573 = vmatpush1.bf16.msra.mxu0 0
    %574 = vmatprep.subr.bf16.mxu0 0
    %575 = vmatpush1.bf16.msra.mxu0 0
    %576 = vmatprep.subr.bf16.mxu0 0
    %577 = vmatpush1.bf16.msra.mxu0 0
    %578 = vmatprep.mubr.bf16.mxu0 0
    %579 = vmatmul.mubr.bf16.gmra.mrb[0].mxu0 %v541
    %v580 = vpop.f32.mrb[0].mxu0
    %v581 = vadd.f32 %v520, %v580
    %v582 = vpop.f32.mrb[0].mxu0
    %v583 = vpop.f32.mrb[0].mxu0
    %v584 = vadd.f32 %v523, %v583
    %v585 = vpop.f32.mrb[0].mxu0
    %586 = vmatprep.mubr.bf16.mxu0 0
    %587 = vmatmul.mubr.bf16.gmra.mrb[0].mxu0 %v544
    %v588 = vpop.f32.mrb[0].mxu0
    %v589 = vadd.f32 %v528, %v588
    %v590 = vpop.f32.mrb[0].mxu0
    %v591 = vpop.f32.mrb[0].mxu0
    %v592 = vadd.f32 %v531, %v591
    %v593 = vpop.f32.mrb[0].mxu0
    %594 = vdwg.mxu0
    %v595 = vpack.c.bf16 %v460, %v459
    %v596 = vpack.c.bf16 %v462, %v461
    %s597 = scalar_lea.vmem %s5, 16
    %v598 = vld [vmem:[%s597] sm:$0xf]
    %v599 = vld [vmem:[%s597 + $0x4] sm:$0xf]
    %v602 = vunpack.c.l.b16 %v598
    %v603 = vunpack.c.l.b16 %v599
    %v604 = vpack.c.b16 %v603, %v602
    %v607 = vsel %vm478, %v595, 0
    %v610 = vsel %vm478, %v596, 0
    %612 = vmatprep.subr.bf16.mxu0 0
    %613 = vmatpush1.bf16.msra.mxu0 %v604
    %614 = vmatprep.subr.bf16.mxu0 0
    %615 = vmatpush1.bf16.msra.mxu0 0
    %616 = vmatprep.subr.bf16.mxu0 0
    %617 = vmatpush1.bf16.msra.mxu0 0
    %618 = vmatprep.subr.bf16.mxu0 0
    %619 = vmatpush1.bf16.msra.mxu0 0
    %620 = vmatprep.subr.bf16.mxu0 0
    %621 = vmatpush1.bf16.msra.mxu0 0
    %622 = vmatprep.subr.bf16.mxu0 0
    %623 = vmatpush1.bf16.msra.mxu0 0
    %624 = vmatprep.subr.bf16.mxu0 0
    %625 = vmatpush1.bf16.msra.mxu0 0
    %626 = vmatprep.subr.bf16.mxu0 0
    %627 = vmatpush1.bf16.msra.mxu0 0
    %628 = vmatprep.subr.bf16.mxu0 0
    %629 = vmatpush1.bf16.msra.mxu0 0
    %630 = vmatprep.subr.bf16.mxu0 0
    %631 = vmatpush1.bf16.msra.mxu0 0
    %632 = vmatprep.subr.bf16.mxu0 0
    %633 = vmatpush1.bf16.msra.mxu0 0
    %634 = vmatprep.subr.bf16.mxu0 0
    %635 = vmatpush1.bf16.msra.mxu0 0
    %636 = vmatprep.subr.bf16.mxu0 0
    %637 = vmatpush1.bf16.msra.mxu0 0
    %638 = vmatprep.subr.bf16.mxu0 0
    %639 = vmatpush1.bf16.msra.mxu0 0
    %640 = vmatprep.subr.bf16.mxu0 0
    %641 = vmatpush1.bf16.msra.mxu0 0
    %642 = vmatprep.subr.bf16.mxu0 0
    %643 = vmatpush1.bf16.msra.mxu0 0
    %644 = vmatprep.mubr.bf16.mxu0 0
    %645 = vmatmul.mubr.bf16.gmra.mrb[0].mxu0 %v607
    %v646 = vpop.f32.mrb[0].mxu0
    %v647 = vadd.f32 0.0, %v646
    %v648 = vpop.f32.mrb[0].mxu0
    %v649 = vpop.f32.mrb[0].mxu0
    %v650 = vadd.f32 0.0, %v649
    %v651 = vpop.f32.mrb[0].mxu0
    %652 = vmatprep.mubr.bf16.mxu0 0
    %653 = vmatmul.mubr.bf16.gmra.mrb[0].mxu0 %v610
    %v654 = vpop.f32.mrb[0].mxu0
    %v655 = vadd.f32 0.0, %v654
    %v656 = vpop.f32.mrb[0].mxu0
    %v657 = vpop.f32.mrb[0].mxu0
    %v658 = vadd.f32 0.0, %v657
    %v659 = vpop.f32.mrb[0].mxu0
    %660 = vdwg.mxu0
    %v661 = vadd.f32 %v581, %v647
    %v662 = vadd.f32 %v584, %v650
    %v663 = vadd.f32 %v589, %v655
    %v664 = vadd.f32 %v592, %v658
    %v665 = vadd.f32 %v661, %v25
    %v666 = vadd.f32 %v662, %v26
    %v667 = vadd.f32 %v663, %v27
    %v668 = vadd.f32 %v664, %v28
    %v669 = vmax.f32 %v665, 0.0
    %v670 = vmax.f32 %v666, 0.0
    %v671 = vmax.f32 %v667, 0.0
    %v672 = vmax.f32 %v668, 0.0
    %v673 = vpack.c.bf16 %v670, %v669
    %v674 = vpack.c.bf16 %v672, %v671
    %s675 = scalar_lea.vmem %s2, 16
    %v676 = vld [vmem:[%s675] sm:$0xf]
    %v677 = vld [vmem:[%s675 + $0x4] sm:$0xf]
    %v678 = vld [vmem:[%s675 + $0x8] sm:$0xf]
    %v679 = vld [vmem:[%s675 + $0xc] sm:$0xf]
    %s680 = scalar_lea.vmem %s3, 1
    %v681 = vld [vmem:[%s680] sm:$0x1]
    %v683 = vlaneseq
    %v684 = vshrl.u32 %v683, 7
    %v685 = vsub.s32 0, %v684
    %v686 = vrot.slane %v681, %v685
    %v692 = vunpack.c.l.b16 %v676
    %v693 = vunpack.c.l.b16 %v677
    %v694 = vunpack.c.l.b16 %v678
    %v695 = vunpack.c.l.b16 %v679
    %v696 = vpack.c.b16 %v693, %v692
    %v697 = vpack.c.b16 %v695, %v694
    %v701 = vsel %vm62, %v673, 0
    %v704 = vsel %vm62, %v674, 0
    %706 = vmatprep.subr.bf16.mxu0 0
    %707 = vmatpush1.bf16.msra.mxu0 %v696
    %708 = vmatprep.subr.bf16.mxu0 0
    %709 = vmatpush1.bf16.msra.mxu0 %v697
    %710 = vmatprep.subr.bf16.mxu0 0
    %711 = vmatpush1.bf16.msra.mxu0 0
    %712 = vmatprep.subr.bf16.mxu0 0
    %713 = vmatpush1.bf16.msra.mxu0 0
    %714 = vmatprep.subr.bf16.mxu0 0
    %715 = vmatpush1.bf16.msra.mxu0 0
    %716 = vmatprep.subr.bf16.mxu0 0
    %717 = vmatpush1.bf16.msra.mxu0 0
    %718 = vmatprep.subr.bf16.mxu0 0
    %719 = vmatpush1.bf16.msra.mxu0 0
    %720 = vmatprep.subr.bf16.mxu0 0
    %721 = vmatpush1.bf16.msra.mxu0 0
    %722 = vmatprep.subr.bf16.mxu0 0
    %723 = vmatpush1.bf16.msra.mxu0 0
    %724 = vmatprep.subr.bf16.mxu0 0
    %725 = vmatpush1.bf16.msra.mxu0 0
    %726 = vmatprep.subr.bf16.mxu0 0
    %727 = vmatpush1.bf16.msra.mxu0 0
    %728 = vmatprep.subr.bf16.mxu0 0
    %729 = vmatpush1.bf16.msra.mxu0 0
    %730 = vmatprep.subr.bf16.mxu0 0
    %731 = vmatpush1.bf16.msra.mxu0 0
    %732 = vmatprep.subr.bf16.mxu0 0
    %733 = vmatpush1.bf16.msra.mxu0 0
    %734 = vmatprep.subr.bf16.mxu0 0
    %735 = vmatpush1.bf16.msra.mxu0 0
    %736 = vmatprep.subr.bf16.mxu0 0
    %737 = vmatpush1.bf16.msra.mxu0 0
    %738 = vmatprep.mubr.bf16.mxu0 0
    %739 = vmatmul.mubr.bf16.gmra.mrb[0].mxu0 %v701
    %v740 = vpop.f32.mrb[0].mxu0
    %v741 = vadd.f32 %v686, %v740
    %v742 = vpop.f32.mrb[0].mxu0
    %v743 = vpop.f32.mrb[0].mxu0
    %v744 = vadd.f32 %v686, %v743
    %v745 = vpop.f32.mrb[0].mxu0
    %746 = vmatprep.mubr.bf16.mxu0 0
    %747 = vmatmul.mubr.bf16.gmra.mrb[0].mxu0 %v704
    %v748 = vpop.f32.mrb[0].mxu0
    %v749 = vadd.f32 %v686, %v748
    %v750 = vpop.f32.mrb[0].mxu0
    %v751 = vpop.f32.mrb[0].mxu0
    %v752 = vadd.f32 %v686, %v751
    %v753 = vpop.f32.mrb[0].mxu0
    %754 = vdwg.mxu0
    %v755 = vmax.f32 %v741, 0.0
    %v756 = vmax.f32 %v744, 0.0
    %v757 = vmax.f32 %v749, 0.0
    %v758 = vmax.f32 %v752, 0.0
    %s759 = scalar_lea.vmem %s4, 64
    %v760 = vld [vmem:[%s759] sm:$0xf]
    %v761 = vld [vmem:[%s759 + $0x4] sm:$0xf]
    %v762 = vld [vmem:[%s759 + $0x8] sm:$0xf]
    %v763 = vld [vmem:[%s759 + $0xc] sm:$0xf]
    %v768 = vunpack.c.l.b16 %v760
    %v769 = vunpack.c.l.b16 %v761
    %v770 = vunpack.c.l.b16 %v762
    %v771 = vunpack.c.l.b16 %v763
    %v772 = vpack.c.b16 %v769, %v768
    %v773 = vpack.c.b16 %v771, %v770
    %776 = vmatprep.subr.bf16.mxu0 0
    %777 = vmatpush1.bf16.msra.mxu0 %v772
    %778 = vmatprep.subr.bf16.mxu0 0
    %779 = vmatpush1.bf16.msra.mxu0 %v773
    %780 = vmatprep.subr.bf16.mxu0 0
    %781 = vmatpush1.bf16.msra.mxu0 0
    %782 = vmatprep.subr.bf16.mxu0 0
    %783 = vmatpush1.bf16.msra.mxu0 0
    %784 = vmatprep.subr.bf16.mxu0 0
    %785 = vmatpush1.bf16.msra.mxu0 0
    %786 = vmatprep.subr.bf16.mxu0 0
    %787 = vmatpush1.bf16.msra.mxu0 0
    %788 = vmatprep.subr.bf16.mxu0 0
    %789 = vmatpush1.bf16.msra.mxu0 0
    %790 = vmatprep.subr.bf16.mxu0 0
    %791 = vmatpush1.bf16.msra.mxu0 0
    %792 = vmatprep.subr.bf16.mxu0 0
    %793 = vmatpush1.bf16.msra.mxu0 0
    %794 = vmatprep.subr.bf16.mxu0 0
    %795 = vmatpush1.bf16.msra.mxu0 0
    %796 = vmatprep.subr.bf16.mxu0 0
    %797 = vmatpush1.bf16.msra.mxu0 0
    %798 = vmatprep.subr.bf16.mxu0 0
    %799 = vmatpush1.bf16.msra.mxu0 0
    %800 = vmatprep.subr.bf16.mxu0 0
    %801 = vmatpush1.bf16.msra.mxu0 0
    %802 = vmatprep.subr.bf16.mxu0 0
    %803 = vmatpush1.bf16.msra.mxu0 0
    %804 = vmatprep.subr.bf16.mxu0 0
    %805 = vmatpush1.bf16.msra.mxu0 0
    %806 = vmatprep.subr.bf16.mxu0 0
    %807 = vmatpush1.bf16.msra.mxu0 0
    %808 = vmatprep.mubr.bf16.mxu0 0
    %809 = vmatmul.mubr.bf16.gmra.mrb[0].mxu0 %v701
    %v810 = vpop.f32.mrb[0].mxu0
    %v811 = vadd.f32 0.0, %v810
    %v812 = vpop.f32.mrb[0].mxu0
    %v813 = vpop.f32.mrb[0].mxu0
    %v814 = vadd.f32 0.0, %v813
    %v815 = vpop.f32.mrb[0].mxu0
    %816 = vdwg.mxu0
    %s817 = scalar_lea.vmem %s4, 80
    %v818 = vld [vmem:[%s817] sm:$0xf]
    %v819 = vld [vmem:[%s817 + $0x4] sm:$0xf]
    %v820 = vld [vmem:[%s817 + $0x8] sm:$0xf]
    %v821 = vld [vmem:[%s817 + $0xc] sm:$0xf]
    %v826 = vunpack.c.l.b16 %v818
    %v827 = vunpack.c.l.b16 %v819
    %v828 = vunpack.c.l.b16 %v820
    %v829 = vunpack.c.l.b16 %v821
    %v830 = vpack.c.b16 %v827, %v826
    %v831 = vpack.c.b16 %v829, %v828
    %834 = vmatprep.subr.bf16.mxu0 0
    %835 = vmatpush1.bf16.msra.mxu0 %v830
    %836 = vmatprep.subr.bf16.mxu0 0
    %837 = vmatpush1.bf16.msra.mxu0 %v831
    %838 = vmatprep.subr.bf16.mxu0 0
    %839 = vmatpush1.bf16.msra.mxu0 0
    %840 = vmatprep.subr.bf16.mxu0 0
    %841 = vmatpush1.bf16.msra.mxu0 0
    %842 = vmatprep.subr.bf16.mxu0 0
    %843 = vmatpush1.bf16.msra.mxu0 0
    %844 = vmatprep.subr.bf16.mxu0 0
    %845 = vmatpush1.bf16.msra.mxu0 0
    %846 = vmatprep.subr.bf16.mxu0 0
    %847 = vmatpush1.bf16.msra.mxu0 0
    %848 = vmatprep.subr.bf16.mxu0 0
    %849 = vmatpush1.bf16.msra.mxu0 0
    %850 = vmatprep.subr.bf16.mxu0 0
    %851 = vmatpush1.bf16.msra.mxu0 0
    %852 = vmatprep.subr.bf16.mxu0 0
    %853 = vmatpush1.bf16.msra.mxu0 0
    %854 = vmatprep.subr.bf16.mxu0 0
    %855 = vmatpush1.bf16.msra.mxu0 0
    %856 = vmatprep.subr.bf16.mxu0 0
    %857 = vmatpush1.bf16.msra.mxu0 0
    %858 = vmatprep.subr.bf16.mxu0 0
    %859 = vmatpush1.bf16.msra.mxu0 0
    %860 = vmatprep.subr.bf16.mxu0 0
    %861 = vmatpush1.bf16.msra.mxu0 0
    %862 = vmatprep.subr.bf16.mxu0 0
    %863 = vmatpush1.bf16.msra.mxu0 0
    %864 = vmatprep.subr.bf16.mxu0 0
    %865 = vmatpush1.bf16.msra.mxu0 0
    %866 = vmatprep.mubr.bf16.mxu0 0
    %867 = vmatmul.mubr.bf16.gmra.mrb[0].mxu0 %v704
    %v868 = vpop.f32.mrb[0].mxu0
    %v869 = vadd.f32 0.0, %v868
    %v870 = vpop.f32.mrb[0].mxu0
    %v871 = vpop.f32.mrb[0].mxu0
    %v872 = vadd.f32 0.0, %v871
    %v873 = vpop.f32.mrb[0].mxu0
    %874 = vdwg.mxu0
    %s875 = scalar_lea.vmem %s4, 96
    %v876 = vld [vmem:[%s875] sm:$0xf]
    %v877 = vld [vmem:[%s875 + $0x4] sm:$0xf]
    %v878 = vld [vmem:[%s875 + $0x8] sm:$0xf]
    %v879 = vld [vmem:[%s875 + $0xc] sm:$0xf]
    %v884 = vunpack.c.l.b16 %v876
    %v885 = vunpack.c.l.b16 %v877
    %v886 = vunpack.c.l.b16 %v878
    %v887 = vunpack.c.l.b16 %v879
    %v888 = vpack.c.b16 %v885, %v884
    %v889 = vpack.c.b16 %v887, %v886
    %892 = vmatprep.subr.bf16.mxu0 0
    %893 = vmatpush1.bf16.msra.mxu0 %v888
    %894 = vmatprep.subr.bf16.mxu0 0
    %895 = vmatpush1.bf16.msra.mxu0 %v889
    %896 = vmatprep.subr.bf16.mxu0 0
    %897 = vmatpush1.bf16.msra.mxu0 0
    %898 = vmatprep.subr.bf16.mxu0 0
    %899 = vmatpush1.bf16.msra.mxu0 0
    %900 = vmatprep.subr.bf16.mxu0 0
    %901 = vmatpush1.bf16.msra.mxu0 0
    %902 = vmatprep.subr.bf16.mxu0 0
    %903 = vmatpush1.bf16.msra.mxu0 0
    %904 = vmatprep.subr.bf16.mxu0 0
    %905 = vmatpush1.bf16.msra.mxu0 0
    %906 = vmatprep.subr.bf16.mxu0 0
    %907 = vmatpush1.bf16.msra.mxu0 0
    %908 = vmatprep.subr.bf16.mxu0 0
    %909 = vmatpush1.bf16.msra.mxu0 0
    %910 = vmatprep.subr.bf16.mxu0 0
    %911 = vmatpush1.bf16.msra.mxu0 0
    %912 = vmatprep.subr.bf16.mxu0 0
    %913 = vmatpush1.bf16.msra.mxu0 0
    %914 = vmatprep.subr.bf16.mxu0 0
    %915 = vmatpush1.bf16.msra.mxu0 0
    %916 = vmatprep.subr.bf16.mxu0 0
    %917 = vmatpush1.bf16.msra.mxu0 0
    %918 = vmatprep.subr.bf16.mxu0 0
    %919 = vmatpush1.bf16.msra.mxu0 0
    %920 = vmatprep.subr.bf16.mxu0 0
    %921 = vmatpush1.bf16.msra.mxu0 0
    %922 = vmatprep.subr.bf16.mxu0 0
    %923 = vmatpush1.bf16.msra.mxu0 0
    %924 = vmatprep.mubr.bf16.mxu0 0
    %925 = vmatmul.mubr.bf16.gmra.mrb[0].mxu0 %v701
    %v926 = vpop.f32.mrb[0].mxu0
    %v927 = vadd.f32 0.0, %v926
    %v928 = vpop.f32.mrb[0].mxu0
    %v929 = vpop.f32.mrb[0].mxu0
    %v930 = vadd.f32 0.0, %v929
    %v931 = vpop.f32.mrb[0].mxu0
    %932 = vdwg.mxu0
    %s933 = scalar_lea.vmem %s4, 112
    %v934 = vld [vmem:[%s933] sm:$0xf]
    %v935 = vld [vmem:[%s933 + $0x4] sm:$0xf]
    %v936 = vld [vmem:[%s933 + $0x8] sm:$0xf]
    %v937 = vld [vmem:[%s933 + $0xc] sm:$0xf]
    %v942 = vunpack.c.l.b16 %v934
    %v943 = vunpack.c.l.b16 %v935
    %v944 = vunpack.c.l.b16 %v936
    %v945 = vunpack.c.l.b16 %v937
    %v946 = vpack.c.b16 %v943, %v942
    %v947 = vpack.c.b16 %v945, %v944
    %950 = vmatprep.subr.bf16.mxu0 0
    %951 = vmatpush1.bf16.msra.mxu0 %v946
    %952 = vmatprep.subr.bf16.mxu0 0
    %953 = vmatpush1.bf16.msra.mxu0 %v947
    %954 = vmatprep.subr.bf16.mxu0 0
    %955 = vmatpush1.bf16.msra.mxu0 0
    %956 = vmatprep.subr.bf16.mxu0 0
    %957 = vmatpush1.bf16.msra.mxu0 0
    %958 = vmatprep.subr.bf16.mxu0 0
    %959 = vmatpush1.bf16.msra.mxu0 0
    %960 = vmatprep.subr.bf16.mxu0 0
    %961 = vmatpush1.bf16.msra.mxu0 0
    %962 = vmatprep.subr.bf16.mxu0 0
    %963 = vmatpush1.bf16.msra.mxu0 0
    %964 = vmatprep.subr.bf16.mxu0 0
    %965 = vmatpush1.bf16.msra.mxu0 0
    %966 = vmatprep.subr.bf16.mxu0 0
    %967 = vmatpush1.bf16.msra.mxu0 0
    %968 = vmatprep.subr.bf16.mxu0 0
    %969 = vmatpush1.bf16.msra.mxu0 0
    %970 = vmatprep.subr.bf16.mxu0 0
    %971 = vmatpush1.bf16.msra.mxu0 0
    %972 = vmatprep.subr.bf16.mxu0 0
    %973 = vmatpush1.bf16.msra.mxu0 0
    %974 = vmatprep.subr.bf16.mxu0 0
    %975 = vmatpush1.bf16.msra.mxu0 0
    %976 = vmatprep.subr.bf16.mxu0 0
    %977 = vmatpush1.bf16.msra.mxu0 0
    %978 = vmatprep.subr.bf16.mxu0 0
    %979 = vmatpush1.bf16.msra.mxu0 0
    %980 = vmatprep.subr.bf16.mxu0 0
    %981 = vmatpush1.bf16.msra.mxu0 0
    %982 = vmatprep.mubr.bf16.mxu0 0
    %983 = vmatmul.mubr.bf16.gmra.mrb[0].mxu0 %v704
    %v984 = vpop.f32.mrb[0].mxu0
    %v985 = vadd.f32 0.0, %v984
    %v986 = vpop.f32.mrb[0].mxu0
    %v987 = vpop.f32.mrb[0].mxu0
    %v988 = vadd.f32 0.0, %v987
    %v989 = vpop.f32.mrb[0].mxu0
    %990 = vdwg.mxu0
    %v991 = vpack.c.bf16 %v814, %v811
    %v992 = vpack.c.bf16 %v872, %v869
    %v993 = vpack.c.bf16 %v930, %v927
    %v994 = vpack.c.bf16 %v988, %v985
    %995 = vmatprep.subr.bf16.mxu0 0
    %996 = vmatpush1.bf16.msra.mxu0 %v991
    %997 = vmatprep.subr.bf16.mxu0 0
    %998 = vmatpush1.bf16.msra.mxu0 %v992
    %999 = vmatprep.subr.bf16.mxu0 0
    %1000 = vmatpush1.bf16.msra.mxu0 %v993
    %1001 = vmatprep.subr.bf16.mxu0 0
    %1002 = vmatpush1.bf16.msra.mxu0 %v994
    %1003 = vmatprep.subr.bf16.mxu0 0
    %1004 = vmatpush1.bf16.msra.mxu0 0
    %1005 = vmatprep.subr.bf16.mxu0 0
    %1006 = vmatpush1.bf16.msra.mxu0 0
    %1007 = vmatprep.subr.bf16.mxu0 0
    %1008 = vmatpush1.bf16.msra.mxu0 0
    %1009 = vmatprep.subr.bf16.mxu0 0
    %1010 = vmatpush1.bf16.msra.mxu0 0
    %1011 = vmatprep.subr.bf16.mxu0 0
    %1012 = vmatpush1.bf16.msra.mxu0 0
    %1013 = vmatprep.subr.bf16.mxu0 0
    %1014 = vmatpush1.bf16.msra.mxu0 0
    %1015 = vmatprep.subr.bf16.mxu0 0
    %1016 = vmatpush1.bf16.msra.mxu0 0
    %1017 = vmatprep.subr.bf16.mxu0 0
    %1018 = vmatpush1.bf16.msra.mxu0 0
    %1019 = vmatprep.subr.bf16.mxu0 0
    %1020 = vmatpush1.bf16.msra.mxu0 0
    %1021 = vmatprep.subr.bf16.mxu0 0
    %1022 = vmatpush1.bf16.msra.mxu0 0
    %1023 = vmatprep.subr.bf16.mxu0 0
    %1024 = vmatpush1.bf16.msra.mxu0 0
    %1025 = vmatprep.subr.bf16.mxu0 0
    %1026 = vmatpush1.bf16.msra.mxu0 0
    %1027 = vmatprep.mubr.bf16.mxu0 0
    %1028 = vmatmul.mubr.bf16.gmra.mrb[0].mxu0 %v379
    %v1029 = vpop.f32.mrb[0].mxu0
    %v1030 = vadd.f32 0.0, %v1029
    %v1031 = vpop.f32.mrb[0].mxu0
    %v1032 = vpop.f32.mrb[0].mxu0
    %v1033 = vadd.f32 0.0, %v1032
    %v1034 = vpop.f32.mrb[0].mxu0
    %1035 = vmatprep.mubr.bf16.mxu0 0
    %1036 = vmatmul.mubr.bf16.gmra.mrb[0].mxu0 %v382
    %v1037 = vpop.f32.mrb[0].mxu0
    %v1038 = vadd.f32 0.0, %v1037
    %v1039 = vpop.f32.mrb[0].mxu0
    %v1040 = vpop.f32.mrb[0].mxu0
    %v1041 = vadd.f32 0.0, %v1040
    %v1042 = vpop.f32.mrb[0].mxu0
    %1043 = vmatprep.mubr.bf16.mxu0 0
    %1044 = vmatmul.mubr.bf16.gmra.mrb[0].mxu0 %v385
    %v1045 = vpop.f32.mrb[0].mxu0
    %v1046 = vadd.f32 0.0, %v1045
    %v1047 = vpop.f32.mrb[0].mxu0
    %v1048 = vpop.f32.mrb[0].mxu0
    %v1049 = vadd.f32 0.0, %v1048
    %v1050 = vpop.f32.mrb[0].mxu0
    %1051 = vmatprep.mubr.bf16.mxu0 0
    %1052 = vmatmul.mubr.bf16.gmra.mrb[0].mxu0 %v388
    %v1053 = vpop.f32.mrb[0].mxu0
    %v1054 = vadd.f32 0.0, %v1053
    %v1055 = vpop.f32.mrb[0].mxu0
    %v1056 = vpop.f32.mrb[0].mxu0
    %v1057 = vadd.f32 0.0, %v1056
    %v1058 = vpop.f32.mrb[0].mxu0
    %1059 = vdwg.mxu0
    %v1060 = vmax.f32 %v1030, 0.0
    %v1061 = vmax.f32 %v1033, 0.0
    %v1062 = vmax.f32 %v1038, 0.0
    %v1063 = vmax.f32 %v1041, 0.0
    %v1064 = vmax.f32 %v1046, 0.0
    %v1065 = vmax.f32 %v1049, 0.0
    %v1066 = vmax.f32 %v1054, 0.0
    %v1067 = vmax.f32 %v1057, 0.0
    %v1068 = vpack.c.bf16 %v756, %v755
    %v1069 = vpack.c.bf16 %v758, %v757
    %s1070 = scalar_lea.vmem %s5, 24
    %v1071 = vld [vmem:[%s1070] sm:$0xf]
    %v1072 = vld [vmem:[%s1070 + $0x4] sm:$0xf]
    %v1073 = vpack.c.bf16 %v1061, %v1060
    %v1074 = vpack.c.bf16 %v1063, %v1062
    %s1075 = scalar_lea.vmem %s5, 32
    %v1076 = vld [vmem:[%s1075] sm:$0xf]
    %v1077 = vld [vmem:[%s1075 + $0x4] sm:$0xf]
    %v1080 = vunpack.c.l.b16 %v1076
    %v1081 = vunpack.c.l.b16 %v1077
    %v1082 = vpack.c.b16 %v1081, %v1080
    %v1085 = vsel %vm478, %v1073, 0
    %v1088 = vsel %vm478, %v1074, 0
    %1090 = vmatprep.subr.bf16.mxu0 0
    %1091 = vmatpush1.bf16.msra.mxu0 %v1082
    %1092 = vmatprep.subr.bf16.mxu0 0
    %1093 = vmatpush1.bf16.msra.mxu0 0
    %1094 = vmatprep.subr.bf16.mxu0 0
    %1095 = vmatpush1.bf16.msra.mxu0 0
    %1096 = vmatprep.subr.bf16.mxu0 0
    %1097 = vmatpush1.bf16.msra.mxu0 0
    %1098 = vmatprep.subr.bf16.mxu0 0
    %1099 = vmatpush1.bf16.msra.mxu0 0
    %1100 = vmatprep.subr.bf16.mxu0 0
    %1101 = vmatpush1.bf16.msra.mxu0 0
    %1102 = vmatprep.subr.bf16.mxu0 0
    %1103 = vmatpush1.bf16.msra.mxu0 0
    %1104 = vmatprep.subr.bf16.mxu0 0
    %1105 = vmatpush1.bf16.msra.mxu0 0
    %1106 = vmatprep.subr.bf16.mxu0 0
    %1107 = vmatpush1.bf16.msra.mxu0 0
    %1108 = vmatprep.subr.bf16.mxu0 0
    %1109 = vmatpush1.bf16.msra.mxu0 0
    %1110 = vmatprep.subr.bf16.mxu0 0
    %1111 = vmatpush1.bf16.msra.mxu0 0
    %1112 = vmatprep.subr.bf16.mxu0 0
    %1113 = vmatpush1.bf16.msra.mxu0 0
    %1114 = vmatprep.subr.bf16.mxu0 0
    %1115 = vmatpush1.bf16.msra.mxu0 0
    %1116 = vmatprep.subr.bf16.mxu0 0
    %1117 = vmatpush1.bf16.msra.mxu0 0
    %1118 = vmatprep.subr.bf16.mxu0 0
    %1119 = vmatpush1.bf16.msra.mxu0 0
    %1120 = vmatprep.subr.bf16.mxu0 0
    %1121 = vmatpush1.bf16.msra.mxu0 0
    %1122 = vmatprep.mubr.bf16.mxu0 0
    %1123 = vmatmul.mubr.bf16.gmra.mrb[0].mxu0 %v1085
    %v1124 = vpop.f32.mrb[0].mxu0
    %v1125 = vadd.f32 0.0, %v1124
    %v1126 = vpop.f32.mrb[0].mxu0
    %v1127 = vpop.f32.mrb[0].mxu0
    %v1128 = vadd.f32 0.0, %v1127
    %v1129 = vpop.f32.mrb[0].mxu0
    %1130 = vmatprep.mubr.bf16.mxu0 0
    %1131 = vmatmul.mubr.bf16.gmra.mrb[0].mxu0 %v1088
    %v1132 = vpop.f32.mrb[0].mxu0
    %v1133 = vadd.f32 0.0, %v1132
    %v1134 = vpop.f32.mrb[0].mxu0
    %v1135 = vpop.f32.mrb[0].mxu0
    %v1136 = vadd.f32 0.0, %v1135
    %v1137 = vpop.f32.mrb[0].mxu0
    %1138 = vdwg.mxu0
    %v1141 = vunpack.c.l.b16 %v1071
    %v1142 = vunpack.c.l.b16 %v1072
    %v1143 = vpack.c.b16 %v1142, %v1141
    %v1146 = vsel %vm478, %v1068, 0
    %v1149 = vsel %vm478, %v1069, 0
    %1151 = vmatprep.subr.bf16.mxu0 0
    %1152 = vmatpush1.bf16.msra.mxu0 %v1143
    %1153 = vmatprep.subr.bf16.mxu0 0
    %1154 = vmatpush1.bf16.msra.mxu0 0
    %1155 = vmatprep.subr.bf16.mxu0 0
    %1156 = vmatpush1.bf16.msra.mxu0 0
    %1157 = vmatprep.subr.bf16.mxu0 0
    %1158 = vmatpush1.bf16.msra.mxu0 0
    %1159 = vmatprep.subr.bf16.mxu0 0
    %1160 = vmatpush1.bf16.msra.mxu0 0
    %1161 = vmatprep.subr.bf16.mxu0 0
    %1162 = vmatpush1.bf16.msra.mxu0 0
    %1163 = vmatprep.subr.bf16.mxu0 0
    %1164 = vmatpush1.bf16.msra.mxu0 0
    %1165 = vmatprep.subr.bf16.mxu0 0
    %1166 = vmatpush1.bf16.msra.mxu0 0
    %1167 = vmatprep.subr.bf16.mxu0 0
    %1168 = vmatpush1.bf16.msra.mxu0 0
    %1169 = vmatprep.subr.bf16.mxu0 0
    %1170 = vmatpush1.bf16.msra.mxu0 0
    %1171 = vmatprep.subr.bf16.mxu0 0
    %1172 = vmatpush1.bf16.msra.mxu0 0
    %1173 = vmatprep.subr.bf16.mxu0 0
    %1174 = vmatpush1.bf16.msra.mxu0 0
    %1175 = vmatprep.subr.bf16.mxu0 0
    %1176 = vmatpush1.bf16.msra.mxu0 0
    %1177 = vmatprep.subr.bf16.mxu0 0
    %1178 = vmatpush1.bf16.msra.mxu0 0
    %1179 = vmatprep.subr.bf16.mxu0 0
    %1180 = vmatpush1.bf16.msra.mxu0 0
    %1181 = vmatprep.subr.bf16.mxu0 0
    %1182 = vmatpush1.bf16.msra.mxu0 0
    %1183 = vmatprep.mubr.bf16.mxu0 0
    %1184 = vmatmul.mubr.bf16.gmra.mrb[0].mxu0 %v1146
    %v1185 = vpop.f32.mrb[0].mxu0
    %v1186 = vadd.f32 %v1125, %v1185
    %v1187 = vpop.f32.mrb[0].mxu0
    %v1188 = vpop.f32.mrb[0].mxu0
    %v1189 = vadd.f32 %v1128, %v1188
    %v1190 = vpop.f32.mrb[0].mxu0
    %1191 = vmatprep.mubr.bf16.mxu0 0
    %1192 = vmatmul.mubr.bf16.gmra.mrb[0].mxu0 %v1149
    %v1193 = vpop.f32.mrb[0].mxu0
    %v1194 = vadd.f32 %v1133, %v1193
    %v1195 = vpop.f32.mrb[0].mxu0
    %v1196 = vpop.f32.mrb[0].mxu0
    %v1197 = vadd.f32 %v1136, %v1196
    %v1198 = vpop.f32.mrb[0].mxu0
    %1199 = vdwg.mxu0
    %v1200 = vpack.c.bf16 %v1065, %v1064
    %v1201 = vpack.c.bf16 %v1067, %v1066
    %s1202 = scalar_lea.vmem %s5, 40
    %v1203 = vld [vmem:[%s1202] sm:$0xf]
    %v1204 = vld [vmem:[%s1202 + $0x4] sm:$0xf]
    %v1207 = vunpack.c.l.b16 %v1203
    %v1208 = vunpack.c.l.b16 %v1204
    %v1209 = vpack.c.b16 %v1208, %v1207
    %v1212 = vsel %vm478, %v1200, 0
    %v1215 = vsel %vm478, %v1201, 0
    %1217 = vmatprep.subr.bf16.mxu0 0
    %1218 = vmatpush1.bf16.msra.mxu0 %v1209
    %1219 = vmatprep.subr.bf16.mxu0 0
    %1220 = vmatpush1.bf16.msra.mxu0 0
    %1221 = vmatprep.subr.bf16.mxu0 0
    %1222 = vmatpush1.bf16.msra.mxu0 0
    %1223 = vmatprep.subr.bf16.mxu0 0
    %1224 = vmatpush1.bf16.msra.mxu0 0
    %1225 = vmatprep.subr.bf16.mxu0 0
    %1226 = vmatpush1.bf16.msra.mxu0 0
    %1227 = vmatprep.subr.bf16.mxu0 0
    %1228 = vmatpush1.bf16.msra.mxu0 0
    %1229 = vmatprep.subr.bf16.mxu0 0
    %1230 = vmatpush1.bf16.msra.mxu0 0
    %1231 = vmatprep.subr.bf16.mxu0 0
    %1232 = vmatpush1.bf16.msra.mxu0 0
    %1233 = vmatprep.subr.bf16.mxu0 0
    %1234 = vmatpush1.bf16.msra.mxu0 0
    %1235 = vmatprep.subr.bf16.mxu0 0
    %1236 = vmatpush1.bf16.msra.mxu0 0
    %1237 = vmatprep.subr.bf16.mxu0 0
    %1238 = vmatpush1.bf16.msra.mxu0 0
    %1239 = vmatprep.subr.bf16.mxu0 0
    %1240 = vmatpush1.bf16.msra.mxu0 0
    %1241 = vmatprep.subr.bf16.mxu0 0
    %1242 = vmatpush1.bf16.msra.mxu0 0
    %1243 = vmatprep.subr.bf16.mxu0 0
    %1244 = vmatpush1.bf16.msra.mxu0 0
    %1245 = vmatprep.subr.bf16.mxu0 0
    %1246 = vmatpush1.bf16.msra.mxu0 0
    %1247 = vmatprep.subr.bf16.mxu0 0
    %1248 = vmatpush1.bf16.msra.mxu0 0
    %1249 = vmatprep.mubr.bf16.mxu0 0
    %1250 = vmatmul.mubr.bf16.gmra.mrb[0].mxu0 %v1212
    %v1251 = vpop.f32.mrb[0].mxu0
    %v1252 = vadd.f32 0.0, %v1251
    %v1253 = vpop.f32.mrb[0].mxu0
    %v1254 = vpop.f32.mrb[0].mxu0
    %v1255 = vadd.f32 0.0, %v1254
    %v1256 = vpop.f32.mrb[0].mxu0
    %1257 = vmatprep.mubr.bf16.mxu0 0
    %1258 = vmatmul.mubr.bf16.gmra.mrb[0].mxu0 %v1215
    %v1259 = vpop.f32.mrb[0].mxu0
    %v1260 = vadd.f32 0.0, %v1259
    %v1261 = vpop.f32.mrb[0].mxu0
    %v1262 = vpop.f32.mrb[0].mxu0
    %v1263 = vadd.f32 0.0, %v1262
    %v1264 = vpop.f32.mrb[0].mxu0
    %1265 = vdwg.mxu0
    %v1266 = vadd.f32 %v1186, %v1252
    %v1267 = vadd.f32 %v1189, %v1255
    %v1268 = vadd.f32 %v1194, %v1260
    %v1269 = vadd.f32 %v1197, %v1263
    %v1270 = vadd.f32 %v1266, %v669
    %v1271 = vadd.f32 %v1267, %v670
    %v1272 = vadd.f32 %v1268, %v671
    %v1273 = vadd.f32 %v1269, %v672
    %v1274 = vmax.f32 %v1270, 0.0
    %v1275 = vmax.f32 %v1271, 0.0
    %v1276 = vmax.f32 %v1272, 0.0
    %v1277 = vmax.f32 %v1273, 0.0
    %v1278 = vpack.c.bf16 %v1275, %v1274
    %v1279 = vpack.c.bf16 %v1277, %v1276
    %s1280 = scalar_lea.vmem %s2, 32
    %v1281 = vld [vmem:[%s1280] sm:$0xf]
    %v1282 = vld [vmem:[%s1280 + $0x4] sm:$0xf]
    %v1283 = vld [vmem:[%s1280 + $0x8] sm:$0xf]
    %v1284 = vld [vmem:[%s1280 + $0xc] sm:$0xf]
    %s1285 = scalar_lea.vmem %s3, 2
    %v1286 = vld [vmem:[%s1285] sm:$0x1]
    %v1288 = vlaneseq
    %v1289 = vshrl.u32 %v1288, 7
    %v1290 = vsub.s32 0, %v1289
    %v1291 = vrot.slane %v1286, %v1290
    %v1297 = vunpack.c.l.b16 %v1281
    %v1298 = vunpack.c.l.b16 %v1282
    %v1299 = vunpack.c.l.b16 %v1283
    %v1300 = vunpack.c.l.b16 %v1284
    %v1301 = vpack.c.b16 %v1298, %v1297
    %v1302 = vpack.c.b16 %v1300, %v1299
    %v1306 = vsel %vm62, %v1278, 0
    %v1309 = vsel %vm62, %v1279, 0
    %1311 = vmatprep.subr.bf16.mxu0 0
    %1312 = vmatpush1.bf16.msra.mxu0 %v1301
    %1313 = vmatprep.subr.bf16.mxu0 0
    %1314 = vmatpush1.bf16.msra.mxu0 %v1302
    %1315 = vmatprep.subr.bf16.mxu0 0
    %1316 = vmatpush1.bf16.msra.mxu0 0
    %1317 = vmatprep.subr.bf16.mxu0 0
    %1318 = vmatpush1.bf16.msra.mxu0 0
    %1319 = vmatprep.subr.bf16.mxu0 0
    %1320 = vmatpush1.bf16.msra.mxu0 0
    %1321 = vmatprep.subr.bf16.mxu0 0
    %1322 = vmatpush1.bf16.msra.mxu0 0
    %1323 = vmatprep.subr.bf16.mxu0 0
    %1324 = vmatpush1.bf16.msra.mxu0 0
    %1325 = vmatprep.subr.bf16.mxu0 0
    %1326 = vmatpush1.bf16.msra.mxu0 0
    %1327 = vmatprep.subr.bf16.mxu0 0
    %1328 = vmatpush1.bf16.msra.mxu0 0
    %1329 = vmatprep.subr.bf16.mxu0 0
    %1330 = vmatpush1.bf16.msra.mxu0 0
    %1331 = vmatprep.subr.bf16.mxu0 0
    %1332 = vmatpush1.bf16.msra.mxu0 0
    %1333 = vmatprep.subr.bf16.mxu0 0
    %1334 = vmatpush1.bf16.msra.mxu0 0
    %1335 = vmatprep.subr.bf16.mxu0 0
    %1336 = vmatpush1.bf16.msra.mxu0 0
    %1337 = vmatprep.subr.bf16.mxu0 0
    %1338 = vmatpush1.bf16.msra.mxu0 0
    %1339 = vmatprep.subr.bf16.mxu0 0
    %1340 = vmatpush1.bf16.msra.mxu0 0
    %1341 = vmatprep.subr.bf16.mxu0 0
    %1342 = vmatpush1.bf16.msra.mxu0 0
    %1343 = vmatprep.mubr.bf16.mxu0 0
    %1344 = vmatmul.mubr.bf16.gmra.mrb[0].mxu0 %v1306
    %v1345 = vpop.f32.mrb[0].mxu0
    %v1346 = vadd.f32 %v1291, %v1345
    %v1347 = vpop.f32.mrb[0].mxu0
    %v1348 = vpop.f32.mrb[0].mxu0
    %v1349 = vadd.f32 %v1291, %v1348
    %v1350 = vpop.f32.mrb[0].mxu0
    %1351 = vmatprep.mubr.bf16.mxu0 0
    %1352 = vmatmul.mubr.bf16.gmra.mrb[0].mxu0 %v1309
    %v1353 = vpop.f32.mrb[0].mxu0
    %v1354 = vadd.f32 %v1291, %v1353
    %v1355 = vpop.f32.mrb[0].mxu0
    %v1356 = vpop.f32.mrb[0].mxu0
    %v1357 = vadd.f32 %v1291, %v1356
    %v1358 = vpop.f32.mrb[0].mxu0
    %1359 = vdwg.mxu0
    %v1360 = vmax.f32 %v1346, 0.0
    %v1361 = vmax.f32 %v1349, 0.0
    %v1362 = vmax.f32 %v1354, 0.0
    %v1363 = vmax.f32 %v1357, 0.0
    %s1364 = scalar_lea.vmem %s4, 128
    %v1365 = vld [vmem:[%s1364] sm:$0xf]
    %v1366 = vld [vmem:[%s1364 + $0x4] sm:$0xf]
    %v1367 = vld [vmem:[%s1364 + $0x8] sm:$0xf]
    %v1368 = vld [vmem:[%s1364 + $0xc] sm:$0xf]
    %v1373 = vunpack.c.l.b16 %v1365
    %v1374 = vunpack.c.l.b16 %v1366
    %v1375 = vunpack.c.l.b16 %v1367
    %v1376 = vunpack.c.l.b16 %v1368
    %v1377 = vpack.c.b16 %v1374, %v1373
    %v1378 = vpack.c.b16 %v1376, %v1375
    %1381 = vmatprep.subr.bf16.mxu0 0
    %1382 = vmatpush1.bf16.msra.mxu0 %v1377
    %1383 = vmatprep.subr.bf16.mxu0 0
    %1384 = vmatpush1.bf16.msra.mxu0 %v1378
    %1385 = vmatprep.subr.bf16.mxu0 0
    %1386 = vmatpush1.bf16.msra.mxu0 0
    %1387 = vmatprep.subr.bf16.mxu0 0
    %1388 = vmatpush1.bf16.msra.mxu0 0
    %1389 = vmatprep.subr.bf16.mxu0 0
    %1390 = vmatpush1.bf16.msra.mxu0 0
    %1391 = vmatprep.subr.bf16.mxu0 0
    %1392 = vmatpush1.bf16.msra.mxu0 0
    %1393 = vmatprep.subr.bf16.mxu0 0
    %1394 = vmatpush1.bf16.msra.mxu0 0
    %1395 = vmatprep.subr.bf16.mxu0 0
    %1396 = vmatpush1.bf16.msra.mxu0 0
    %1397 = vmatprep.subr.bf16.mxu0 0
    %1398 = vmatpush1.bf16.msra.mxu0 0
    %1399 = vmatprep.subr.bf16.mxu0 0
    %1400 = vmatpush1.bf16.msra.mxu0 0
    %1401 = vmatprep.subr.bf16.mxu0 0
    %1402 = vmatpush1.bf16.msra.mxu0 0
    %1403 = vmatprep.subr.bf16.mxu0 0
    %1404 = vmatpush1.bf16.msra.mxu0 0
    %1405 = vmatprep.subr.bf16.mxu0 0
    %1406 = vmatpush1.bf16.msra.mxu0 0
    %1407 = vmatprep.subr.bf16.mxu0 0
    %1408 = vmatpush1.bf16.msra.mxu0 0
    %1409 = vmatprep.subr.bf16.mxu0 0
    %1410 = vmatpush1.bf16.msra.mxu0 0
    %1411 = vmatprep.subr.bf16.mxu0 0
    %1412 = vmatpush1.bf16.msra.mxu0 0
    %1413 = vmatprep.mubr.bf16.mxu0 0
    %1414 = vmatmul.mubr.bf16.gmra.mrb[0].mxu0 %v1306
    %v1415 = vpop.f32.mrb[0].mxu0
    %v1416 = vadd.f32 0.0, %v1415
    %v1417 = vpop.f32.mrb[0].mxu0
    %v1418 = vpop.f32.mrb[0].mxu0
    %v1419 = vadd.f32 0.0, %v1418
    %v1420 = vpop.f32.mrb[0].mxu0
    %1421 = vdwg.mxu0
    %s1422 = scalar_lea.vmem %s4, 144
    %v1423 = vld [vmem:[%s1422] sm:$0xf]
    %v1424 = vld [vmem:[%s1422 + $0x4] sm:$0xf]
    %v1425 = vld [vmem:[%s1422 + $0x8] sm:$0xf]
    %v1426 = vld [vmem:[%s1422 + $0xc] sm:$0xf]
    %v1431 = vunpack.c.l.b16 %v1423
    %v1432 = vunpack.c.l.b16 %v1424
    %v1433 = vunpack.c.l.b16 %v1425
    %v1434 = vunpack.c.l.b16 %v1426
    %v1435 = vpack.c.b16 %v1432, %v1431
    %v1436 = vpack.c.b16 %v1434, %v1433
    %1439 = vmatprep.subr.bf16.mxu0 0
    %1440 = vmatpush1.bf16.msra.mxu0 %v1435
    %1441 = vmatprep.subr.bf16.mxu0 0
    %1442 = vmatpush1.bf16.msra.mxu0 %v1436
    %1443 = vmatprep.subr.bf16.mxu0 0
    %1444 = vmatpush1.bf16.msra.mxu0 0
    %1445 = vmatprep.subr.bf16.mxu0 0
    %1446 = vmatpush1.bf16.msra.mxu0 0
    %1447 = vmatprep.subr.bf16.mxu0 0
    %1448 = vmatpush1.bf16.msra.mxu0 0
    %1449 = vmatprep.subr.bf16.mxu0 0
    %1450 = vmatpush1.bf16.msra.mxu0 0
    %1451 = vmatprep.subr.bf16.mxu0 0
    %1452 = vmatpush1.bf16.msra.mxu0 0
    %1453 = vmatprep.subr.bf16.mxu0 0
    %1454 = vmatpush1.bf16.msra.mxu0 0
    %1455 = vmatprep.subr.bf16.mxu0 0
    %1456 = vmatpush1.bf16.msra.mxu0 0
    %1457 = vmatprep.subr.bf16.mxu0 0
    %1458 = vmatpush1.bf16.msra.mxu0 0
    %1459 = vmatprep.subr.bf16.mxu0 0
    %1460 = vmatpush1.bf16.msra.mxu0 0
    %1461 = vmatprep.subr.bf16.mxu0 0
    %1462 = vmatpush1.bf16.msra.mxu0 0
    %1463 = vmatprep.subr.bf16.mxu0 0
    %1464 = vmatpush1.bf16.msra.mxu0 0
    %1465 = vmatprep.subr.bf16.mxu0 0
    %1466 = vmatpush1.bf16.msra.mxu0 0
    %1467 = vmatprep.subr.bf16.mxu0 0
    %1468 = vmatpush1.bf16.msra.mxu0 0
    %1469 = vmatprep.subr.bf16.mxu0 0
    %1470 = vmatpush1.bf16.msra.mxu0 0
    %1471 = vmatprep.mubr.bf16.mxu0 0
    %1472 = vmatmul.mubr.bf16.gmra.mrb[0].mxu0 %v1309
    %v1473 = vpop.f32.mrb[0].mxu0
    %v1474 = vadd.f32 0.0, %v1473
    %v1475 = vpop.f32.mrb[0].mxu0
    %v1476 = vpop.f32.mrb[0].mxu0
    %v1477 = vadd.f32 0.0, %v1476
    %v1478 = vpop.f32.mrb[0].mxu0
    %1479 = vdwg.mxu0
    %s1480 = scalar_lea.vmem %s4, 160
    %v1481 = vld [vmem:[%s1480] sm:$0xf]
    %v1482 = vld [vmem:[%s1480 + $0x4] sm:$0xf]
    %v1483 = vld [vmem:[%s1480 + $0x8] sm:$0xf]
    %v1484 = vld [vmem:[%s1480 + $0xc] sm:$0xf]
    %v1489 = vunpack.c.l.b16 %v1481
    %v1490 = vunpack.c.l.b16 %v1482
    %v1491 = vunpack.c.l.b16 %v1483
    %v1492 = vunpack.c.l.b16 %v1484
    %v1493 = vpack.c.b16 %v1490, %v1489
    %v1494 = vpack.c.b16 %v1492, %v1491
    %1497 = vmatprep.subr.bf16.mxu0 0
    %1498 = vmatpush1.bf16.msra.mxu0 %v1493
    %1499 = vmatprep.subr.bf16.mxu0 0
    %1500 = vmatpush1.bf16.msra.mxu0 %v1494
    %1501 = vmatprep.subr.bf16.mxu0 0
    %1502 = vmatpush1.bf16.msra.mxu0 0
    %1503 = vmatprep.subr.bf16.mxu0 0
    %1504 = vmatpush1.bf16.msra.mxu0 0
    %1505 = vmatprep.subr.bf16.mxu0 0
    %1506 = vmatpush1.bf16.msra.mxu0 0
    %1507 = vmatprep.subr.bf16.mxu0 0
    %1508 = vmatpush1.bf16.msra.mxu0 0
    %1509 = vmatprep.subr.bf16.mxu0 0
    %1510 = vmatpush1.bf16.msra.mxu0 0
    %1511 = vmatprep.subr.bf16.mxu0 0
    %1512 = vmatpush1.bf16.msra.mxu0 0
    %1513 = vmatprep.subr.bf16.mxu0 0
    %1514 = vmatpush1.bf16.msra.mxu0 0
    %1515 = vmatprep.subr.bf16.mxu0 0
    %1516 = vmatpush1.bf16.msra.mxu0 0
    %1517 = vmatprep.subr.bf16.mxu0 0
    %1518 = vmatpush1.bf16.msra.mxu0 0
    %1519 = vmatprep.subr.bf16.mxu0 0
    %1520 = vmatpush1.bf16.msra.mxu0 0
    %1521 = vmatprep.subr.bf16.mxu0 0
    %1522 = vmatpush1.bf16.msra.mxu0 0
    %1523 = vmatprep.subr.bf16.mxu0 0
    %1524 = vmatpush1.bf16.msra.mxu0 0
    %1525 = vmatprep.subr.bf16.mxu0 0
    %1526 = vmatpush1.bf16.msra.mxu0 0
    %1527 = vmatprep.subr.bf16.mxu0 0
    %1528 = vmatpush1.bf16.msra.mxu0 0
    %1529 = vmatprep.mubr.bf16.mxu0 0
    %1530 = vmatmul.mubr.bf16.gmra.mrb[0].mxu0 %v1306
    %v1531 = vpop.f32.mrb[0].mxu0
    %v1532 = vadd.f32 0.0, %v1531
    %v1533 = vpop.f32.mrb[0].mxu0
    %v1534 = vpop.f32.mrb[0].mxu0
    %v1535 = vadd.f32 0.0, %v1534
    %v1536 = vpop.f32.mrb[0].mxu0
    %1537 = vdwg.mxu0
    %s1538 = scalar_lea.vmem %s4, 176
    %v1539 = vld [vmem:[%s1538] sm:$0xf]
    %v1540 = vld [vmem:[%s1538 + $0x4] sm:$0xf]
    %v1541 = vld [vmem:[%s1538 + $0x8] sm:$0xf]
    %v1542 = vld [vmem:[%s1538 + $0xc] sm:$0xf]
    %v1547 = vunpack.c.l.b16 %v1539
    %v1548 = vunpack.c.l.b16 %v1540
    %v1549 = vunpack.c.l.b16 %v1541
    %v1550 = vunpack.c.l.b16 %v1542
    %v1551 = vpack.c.b16 %v1548, %v1547
    %v1552 = vpack.c.b16 %v1550, %v1549
    %1555 = vmatprep.subr.bf16.mxu0 0
    %1556 = vmatpush1.bf16.msra.mxu0 %v1551
    %1557 = vmatprep.subr.bf16.mxu0 0
    %1558 = vmatpush1.bf16.msra.mxu0 %v1552
    %1559 = vmatprep.subr.bf16.mxu0 0
    %1560 = vmatpush1.bf16.msra.mxu0 0
    %1561 = vmatprep.subr.bf16.mxu0 0
    %1562 = vmatpush1.bf16.msra.mxu0 0
    %1563 = vmatprep.subr.bf16.mxu0 0
    %1564 = vmatpush1.bf16.msra.mxu0 0
    %1565 = vmatprep.subr.bf16.mxu0 0
    %1566 = vmatpush1.bf16.msra.mxu0 0
    %1567 = vmatprep.subr.bf16.mxu0 0
    %1568 = vmatpush1.bf16.msra.mxu0 0
    %1569 = vmatprep.subr.bf16.mxu0 0
    %1570 = vmatpush1.bf16.msra.mxu0 0
    %1571 = vmatprep.subr.bf16.mxu0 0
    %1572 = vmatpush1.bf16.msra.mxu0 0
    %1573 = vmatprep.subr.bf16.mxu0 0
    %1574 = vmatpush1.bf16.msra.mxu0 0
    %1575 = vmatprep.subr.bf16.mxu0 0
    %1576 = vmatpush1.bf16.msra.mxu0 0
    %1577 = vmatprep.subr.bf16.mxu0 0
    %1578 = vmatpush1.bf16.msra.mxu0 0
    %1579 = vmatprep.subr.bf16.mxu0 0
    %1580 = vmatpush1.bf16.msra.mxu0 0
    %1581 = vmatprep.subr.bf16.mxu0 0
    %1582 = vmatpush1.bf16.msra.mxu0 0
    %1583 = vmatprep.subr.bf16.mxu0 0
    %1584 = vmatpush1.bf16.msra.mxu0 0
    %1585 = vmatprep.subr.bf16.mxu0 0
    %1586 = vmatpush1.bf16.msra.mxu0 0
    %1587 = vmatprep.mubr.bf16.mxu0 0
    %1588 = vmatmul.mubr.bf16.gmra.mrb[0].mxu0 %v1309
    %v1589 = vpop.f32.mrb[0].mxu0
    %v1590 = vadd.f32 0.0, %v1589
    %v1591 = vpop.f32.mrb[0].mxu0
    %v1592 = vpop.f32.mrb[0].mxu0
    %v1593 = vadd.f32 0.0, %v1592
    %v1594 = vpop.f32.mrb[0].mxu0
    %1595 = vdwg.mxu0
    %v1596 = vpack.c.bf16 %v1419, %v1416
    %v1597 = vpack.c.bf16 %v1477, %v1474
    %v1598 = vpack.c.bf16 %v1535, %v1532
    %v1599 = vpack.c.bf16 %v1593, %v1590
    %1600 = vmatprep.subr.bf16.mxu0 0
    %1601 = vmatpush1.bf16.msra.mxu0 %v1596
    %1602 = vmatprep.subr.bf16.mxu0 0
    %1603 = vmatpush1.bf16.msra.mxu0 %v1597
    %1604 = vmatprep.subr.bf16.mxu0 0
    %1605 = vmatpush1.bf16.msra.mxu0 %v1598
    %1606 = vmatprep.subr.bf16.mxu0 0
    %1607 = vmatpush1.bf16.msra.mxu0 %v1599
    %1608 = vmatprep.subr.bf16.mxu0 0
    %1609 = vmatpush1.bf16.msra.mxu0 0
    %1610 = vmatprep.subr.bf16.mxu0 0
    %1611 = vmatpush1.bf16.msra.mxu0 0
    %1612 = vmatprep.subr.bf16.mxu0 0
    %1613 = vmatpush1.bf16.msra.mxu0 0
    %1614 = vmatprep.subr.bf16.mxu0 0
    %1615 = vmatpush1.bf16.msra.mxu0 0
    %1616 = vmatprep.subr.bf16.mxu0 0
    %1617 = vmatpush1.bf16.msra.mxu0 0
    %1618 = vmatprep.subr.bf16.mxu0 0
    %1619 = vmatpush1.bf16.msra.mxu0 0
    %1620 = vmatprep.subr.bf16.mxu0 0
    %1621 = vmatpush1.bf16.msra.mxu0 0
    %1622 = vmatprep.subr.bf16.mxu0 0
    %1623 = vmatpush1.bf16.msra.mxu0 0
    %1624 = vmatprep.subr.bf16.mxu0 0
    %1625 = vmatpush1.bf16.msra.mxu0 0
    %1626 = vmatprep.subr.bf16.mxu0 0
    %1627 = vmatpush1.bf16.msra.mxu0 0
    %1628 = vmatprep.subr.bf16.mxu0 0
    %1629 = vmatpush1.bf16.msra.mxu0 0
    %1630 = vmatprep.subr.bf16.mxu0 0
    %1631 = vmatpush1.bf16.msra.mxu0 0
    %1632 = vmatprep.mubr.bf16.mxu0 0
    %1633 = vmatmul.mubr.bf16.gmra.mrb[0].mxu0 %v379
    %v1634 = vpop.f32.mrb[0].mxu0
    %v1635 = vadd.f32 0.0, %v1634
    %v1636 = vpop.f32.mrb[0].mxu0
    %v1637 = vpop.f32.mrb[0].mxu0
    %v1638 = vadd.f32 0.0, %v1637
    %v1639 = vpop.f32.mrb[0].mxu0
    %1640 = vmatprep.mubr.bf16.mxu0 0
    %1641 = vmatmul.mubr.bf16.gmra.mrb[0].mxu0 %v382
    %v1642 = vpop.f32.mrb[0].mxu0
    %v1643 = vadd.f32 0.0, %v1642
    %v1644 = vpop.f32.mrb[0].mxu0
    %v1645 = vpop.f32.mrb[0].mxu0
    %v1646 = vadd.f32 0.0, %v1645
    %v1647 = vpop.f32.mrb[0].mxu0
    %1648 = vmatprep.mubr.bf16.mxu0 0
    %1649 = vmatmul.mubr.bf16.gmra.mrb[0].mxu0 %v385
    %v1650 = vpop.f32.mrb[0].mxu0
    %v1651 = vadd.f32 0.0, %v1650
    %v1652 = vpop.f32.mrb[0].mxu0
    %v1653 = vpop.f32.mrb[0].mxu0
    %v1654 = vadd.f32 0.0, %v1653
    %v1655 = vpop.f32.mrb[0].mxu0
    %1656 = vmatprep.mubr.bf16.mxu0 0
    %1657 = vmatmul.mubr.bf16.gmra.mrb[0].mxu0 %v388
    %v1658 = vpop.f32.mrb[0].mxu0
    %v1659 = vadd.f32 0.0, %v1658
    %v1660 = vpop.f32.mrb[0].mxu0
    %v1661 = vpop.f32.mrb[0].mxu0
    %v1662 = vadd.f32 0.0, %v1661
    %v1663 = vpop.f32.mrb[0].mxu0
    %1664 = vdwg.mxu0
    %v1665 = vmax.f32 %v1635, 0.0
    %v1666 = vmax.f32 %v1638, 0.0
    %v1667 = vmax.f32 %v1643, 0.0
    %v1668 = vmax.f32 %v1646, 0.0
    %v1669 = vmax.f32 %v1651, 0.0
    %v1670 = vmax.f32 %v1654, 0.0
    %v1671 = vmax.f32 %v1659, 0.0
    %v1672 = vmax.f32 %v1662, 0.0
    %v1673 = vpack.c.bf16 %v1361, %v1360
    %v1674 = vpack.c.bf16 %v1363, %v1362
    %s1675 = scalar_lea.vmem %s5, 48
    %v1676 = vld [vmem:[%s1675] sm:$0xf]
    %v1677 = vld [vmem:[%s1675 + $0x4] sm:$0xf]
    %v1678 = vpack.c.bf16 %v1666, %v1665
    %v1679 = vpack.c.bf16 %v1668, %v1667
    %s1680 = scalar_lea.vmem %s5, 56
    %v1681 = vld [vmem:[%s1680] sm:$0xf]
    %v1682 = vld [vmem:[%s1680 + $0x4] sm:$0xf]
    %v1685 = vunpack.c.l.b16 %v1681
    %v1686 = vunpack.c.l.b16 %v1682
    %v1687 = vpack.c.b16 %v1686, %v1685
    %v1690 = vsel %vm478, %v1678, 0
    %v1693 = vsel %vm478, %v1679, 0
    %1695 = vmatprep.subr.bf16.mxu0 0
    %1696 = vmatpush1.bf16.msra.mxu0 %v1687
    %1697 = vmatprep.subr.bf16.mxu0 0
    %1698 = vmatpush1.bf16.msra.mxu0 0
    %1699 = vmatprep.subr.bf16.mxu0 0
    %1700 = vmatpush1.bf16.msra.mxu0 0
    %1701 = vmatprep.subr.bf16.mxu0 0
    %1702 = vmatpush1.bf16.msra.mxu0 0
    %1703 = vmatprep.subr.bf16.mxu0 0
    %1704 = vmatpush1.bf16.msra.mxu0 0
    %1705 = vmatprep.subr.bf16.mxu0 0
    %1706 = vmatpush1.bf16.msra.mxu0 0
    %1707 = vmatprep.subr.bf16.mxu0 0
    %1708 = vmatpush1.bf16.msra.mxu0 0
    %1709 = vmatprep.subr.bf16.mxu0 0
    %1710 = vmatpush1.bf16.msra.mxu0 0
    %1711 = vmatprep.subr.bf16.mxu0 0
    %1712 = vmatpush1.bf16.msra.mxu0 0
    %1713 = vmatprep.subr.bf16.mxu0 0
    %1714 = vmatpush1.bf16.msra.mxu0 0
    %1715 = vmatprep.subr.bf16.mxu0 0
    %1716 = vmatpush1.bf16.msra.mxu0 0
    %1717 = vmatprep.subr.bf16.mxu0 0
    %1718 = vmatpush1.bf16.msra.mxu0 0
    %1719 = vmatprep.subr.bf16.mxu0 0
    %1720 = vmatpush1.bf16.msra.mxu0 0
    %1721 = vmatprep.subr.bf16.mxu0 0
    %1722 = vmatpush1.bf16.msra.mxu0 0
    %1723 = vmatprep.subr.bf16.mxu0 0
    %1724 = vmatpush1.bf16.msra.mxu0 0
    %1725 = vmatprep.subr.bf16.mxu0 0
    %1726 = vmatpush1.bf16.msra.mxu0 0
    %1727 = vmatprep.mubr.bf16.mxu0 0
    %1728 = vmatmul.mubr.bf16.gmra.mrb[0].mxu0 %v1690
    %v1729 = vpop.f32.mrb[0].mxu0
    %v1730 = vadd.f32 0.0, %v1729
    %v1731 = vpop.f32.mrb[0].mxu0
    %v1732 = vpop.f32.mrb[0].mxu0
    %v1733 = vadd.f32 0.0, %v1732
    %v1734 = vpop.f32.mrb[0].mxu0
    %1735 = vmatprep.mubr.bf16.mxu0 0
    %1736 = vmatmul.mubr.bf16.gmra.mrb[0].mxu0 %v1693
    %v1737 = vpop.f32.mrb[0].mxu0
    %v1738 = vadd.f32 0.0, %v1737
    %v1739 = vpop.f32.mrb[0].mxu0
    %v1740 = vpop.f32.mrb[0].mxu0
    %v1741 = vadd.f32 0.0, %v1740
    %v1742 = vpop.f32.mrb[0].mxu0
    %1743 = vdwg.mxu0
    %v1746 = vunpack.c.l.b16 %v1676
    %v1747 = vunpack.c.l.b16 %v1677
    %v1748 = vpack.c.b16 %v1747, %v1746
    %v1751 = vsel %vm478, %v1673, 0
    %v1754 = vsel %vm478, %v1674, 0
    %1756 = vmatprep.subr.bf16.mxu0 0
    %1757 = vmatpush1.bf16.msra.mxu0 %v1748
    %1758 = vmatprep.subr.bf16.mxu0 0
    %1759 = vmatpush1.bf16.msra.mxu0 0
    %1760 = vmatprep.subr.bf16.mxu0 0
    %1761 = vmatpush1.bf16.msra.mxu0 0
    %1762 = vmatprep.subr.bf16.mxu0 0
    %1763 = vmatpush1.bf16.msra.mxu0 0
    %1764 = vmatprep.subr.bf16.mxu0 0
    %1765 = vmatpush1.bf16.msra.mxu0 0
    %1766 = vmatprep.subr.bf16.mxu0 0
    %1767 = vmatpush1.bf16.msra.mxu0 0
    %1768 = vmatprep.subr.bf16.mxu0 0
    %1769 = vmatpush1.bf16.msra.mxu0 0
    %1770 = vmatprep.subr.bf16.mxu0 0
    %1771 = vmatpush1.bf16.msra.mxu0 0
    %1772 = vmatprep.subr.bf16.mxu0 0
    %1773 = vmatpush1.bf16.msra.mxu0 0
    %1774 = vmatprep.subr.bf16.mxu0 0
    %1775 = vmatpush1.bf16.msra.mxu0 0
    %1776 = vmatprep.subr.bf16.mxu0 0
    %1777 = vmatpush1.bf16.msra.mxu0 0
    %1778 = vmatprep.subr.bf16.mxu0 0
    %1779 = vmatpush1.bf16.msra.mxu0 0
    %1780 = vmatprep.subr.bf16.mxu0 0
    %1781 = vmatpush1.bf16.msra.mxu0 0
    %1782 = vmatprep.subr.bf16.mxu0 0
    %1783 = vmatpush1.bf16.msra.mxu0 0
    %1784 = vmatprep.subr.bf16.mxu0 0
    %1785 = vmatpush1.bf16.msra.mxu0 0
    %1786 = vmatprep.subr.bf16.mxu0 0
    %1787 = vmatpush1.bf16.msra.mxu0 0
    %1788 = vmatprep.mubr.bf16.mxu0 0
    %1789 = vmatmul.mubr.bf16.gmra.mrb[0].mxu0 %v1751
    %v1790 = vpop.f32.mrb[0].mxu0
    %v1791 = vadd.f32 %v1730, %v1790
    %v1792 = vpop.f32.mrb[0].mxu0
    %v1793 = vpop.f32.mrb[0].mxu0
    %v1794 = vadd.f32 %v1733, %v1793
    %v1795 = vpop.f32.mrb[0].mxu0
    %1796 = vmatprep.mubr.bf16.mxu0 0
    %1797 = vmatmul.mubr.bf16.gmra.mrb[0].mxu0 %v1754
    %v1798 = vpop.f32.mrb[0].mxu0
    %v1799 = vadd.f32 %v1738, %v1798
    %v1800 = vpop.f32.mrb[0].mxu0
    %v1801 = vpop.f32.mrb[0].mxu0
    %v1802 = vadd.f32 %v1741, %v1801
    %v1803 = vpop.f32.mrb[0].mxu0
    %1804 = vdwg.mxu0
    %v1805 = vpack.c.bf16 %v1670, %v1669
    %v1806 = vpack.c.bf16 %v1672, %v1671
    %s1807 = scalar_lea.vmem %s5, 64
    %v1808 = vld [vmem:[%s1807] sm:$0xf]
    %v1809 = vld [vmem:[%s1807 + $0x4] sm:$0xf]
    %v1812 = vunpack.c.l.b16 %v1808
    %v1813 = vunpack.c.l.b16 %v1809
    %v1814 = vpack.c.b16 %v1813, %v1812
    %v1817 = vsel %vm478, %v1805, 0
    %v1820 = vsel %vm478, %v1806, 0
    %1822 = vmatprep.subr.bf16.mxu0 0
    %1823 = vmatpush1.bf16.msra.mxu0 %v1814
    %1824 = vmatprep.subr.bf16.mxu0 0
    %1825 = vmatpush1.bf16.msra.mxu0 0
    %1826 = vmatprep.subr.bf16.mxu0 0
    %1827 = vmatpush1.bf16.msra.mxu0 0
    %1828 = vmatprep.subr.bf16.mxu0 0
    %1829 = vmatpush1.bf16.msra.mxu0 0
    %1830 = vmatprep.subr.bf16.mxu0 0
    %1831 = vmatpush1.bf16.msra.mxu0 0
    %1832 = vmatprep.subr.bf16.mxu0 0
    %1833 = vmatpush1.bf16.msra.mxu0 0
    %1834 = vmatprep.subr.bf16.mxu0 0
    %1835 = vmatpush1.bf16.msra.mxu0 0
    %1836 = vmatprep.subr.bf16.mxu0 0
    %1837 = vmatpush1.bf16.msra.mxu0 0
    %1838 = vmatprep.subr.bf16.mxu0 0
    %1839 = vmatpush1.bf16.msra.mxu0 0
    %1840 = vmatprep.subr.bf16.mxu0 0
    %1841 = vmatpush1.bf16.msra.mxu0 0
    %1842 = vmatprep.subr.bf16.mxu0 0
    %1843 = vmatpush1.bf16.msra.mxu0 0
    %1844 = vmatprep.subr.bf16.mxu0 0
    %1845 = vmatpush1.bf16.msra.mxu0 0
    %1846 = vmatprep.subr.bf16.mxu0 0
    %1847 = vmatpush1.bf16.msra.mxu0 0
    %1848 = vmatprep.subr.bf16.mxu0 0
    %1849 = vmatpush1.bf16.msra.mxu0 0
    %1850 = vmatprep.subr.bf16.mxu0 0
    %1851 = vmatpush1.bf16.msra.mxu0 0
    %1852 = vmatprep.subr.bf16.mxu0 0
    %1853 = vmatpush1.bf16.msra.mxu0 0
    %1854 = vmatprep.mubr.bf16.mxu0 0
    %1855 = vmatmul.mubr.bf16.gmra.mrb[0].mxu0 %v1817
    %v1856 = vpop.f32.mrb[0].mxu0
    %v1857 = vadd.f32 0.0, %v1856
    %v1858 = vpop.f32.mrb[0].mxu0
    %v1859 = vpop.f32.mrb[0].mxu0
    %v1860 = vadd.f32 0.0, %v1859
    %v1861 = vpop.f32.mrb[0].mxu0
    %1862 = vmatprep.mubr.bf16.mxu0 0
    %1863 = vmatmul.mubr.bf16.gmra.mrb[0].mxu0 %v1820
    %v1864 = vpop.f32.mrb[0].mxu0
    %v1865 = vadd.f32 0.0, %v1864
    %v1866 = vpop.f32.mrb[0].mxu0
    %v1867 = vpop.f32.mrb[0].mxu0
    %v1868 = vadd.f32 0.0, %v1867
    %v1869 = vpop.f32.mrb[0].mxu0
    %1870 = vdwg.mxu0
    %v1871 = vadd.f32 %v1791, %v1857
    %v1872 = vadd.f32 %v1794, %v1860
    %v1873 = vadd.f32 %v1799, %v1865
    %v1874 = vadd.f32 %v1802, %v1868
    %v1875 = vadd.f32 %v1871, %v1274
    %v1876 = vadd.f32 %v1872, %v1275
    %v1877 = vadd.f32 %v1873, %v1276
    %v1878 = vadd.f32 %v1874, %v1277
    %v1879 = vmax.f32 %v1875, 0.0
    %v1880 = vmax.f32 %v1876, 0.0
    %v1881 = vmax.f32 %v1877, 0.0
    %v1882 = vmax.f32 %v1878, 0.0
    %1883 = vst.msk [vmem:[#allocation2] sm:$0xff] %vm62, %v1879
    %1884 = vst.msk [vmem:[#allocation2 + $0x8] sm:$0xff] %vm62, %v1880
    %1885 = vst.msk [vmem:[#allocation2 + $0x10] sm:$0xff] %vm62, %v1881
    %1886 = vst.msk [vmem:[#allocation2 + $0x18] sm:$0xff] %vm62, %v1882
    // Predicated region
    $region26: #{tpu_custom_call.1} parent=1 // pred_check
      _
    $region27: #{tpu_custom_call.1} parent=1 // pred_check_branch
      %1888 = sbr.rel (0) target = $region29
    $region28: #{tpu_custom_call.1} parent=1 // pred_region
      %s1890 = ssub.s32 512, 512
      %1891 = vsyncadd [#allocation3], %s1890
      %s1892 = sshll.u32 [#allocation2], 4
      %s1893 = int_to_ptr.vmem [resolvable:$true] %s1892
      %1898 = dma.vmem_to_hbm [thread:$0]  %s1893, 512, %s6, [#allocation3], 128, 128, 8
    $region29: #{tpu_custom_call.1} parent=1 // pred_fallthru
      _
    // Predicated region
    $region30: #{tpu_custom_call.1} parent=1 // pred_check
      _
    $region31: #{tpu_custom_call.1} parent=1 // pred_check_branch
      %1900 = sbr.rel (0) target = $region33
    $region32: #{tpu_custom_call.1} parent=1 // pred_region
      %1901 = dma.done [#allocation3], 512
    $region33: #{tpu_custom_call.1} parent=1 // pred_fallthru
      _
    %1902 = vsyncpa [#allocation3], 1

</llo_original>
